<compile_context>
chip_gen: v6e
topology: v6e:2x2x1
jax: 0.10.0
libtpu: 0.0.40
codegen_flags: <defaults>
</compile_context>

<pallas_src>
import math
from functools import partial

import jax
import jax.numpy as jnp
from jax.experimental import pallas as pl
from jax.experimental.pallas import tpu as pltpu


_SQRT_2_OVER_PI = 0.7978845608028654


def _gelu_tanh(x):
    # tanh-GELU rides the EUP slot; ~3e-4 max deviation from torch's erf GELU.
    return 0.5 * x * (1.0 + jnp.tanh(_SQRT_2_OVER_PI * (x + 0.044715 * x * x * x)))


def _soft_hgnn_kernel(x_ref, protot_ref, wca_ref, wcm_ref, bctx_ref,
                      wpre_ref, bpre_ref, wedge_ref, bedge_ref,
                      wnode_ref, bnode_ref, gate_ref,
                      out_ref,
                      off_scr, xu_scr, xpu_scr, xnp_scr,
                      *, inv_scale):
    f32, bf16 = jnp.float32, jnp.bfloat16
    Bt, R, L = x_ref.shape            # packed block: L = k*D lanes (lane-dense)
    D, E = protot_ref.shape
    k = L // D
    N = R * k

    x_p3 = x_ref[...]                                   # (Bt, R, L) lane-dense
    x_p2 = x_p3.reshape(Bt * R, L)                      # leading-dim merge (free)
    x_p2_bf = x_p2.astype(bf16)

    # -------- SoftHyperedgeGeneration: context (mean / max over N nodes) ----
    row_sum = jnp.sum(x_p3, axis=1)                     # (Bt, L)
    row_max = jnp.max(x_p3, axis=1)                     # (Bt, L)
    avg_ctx = row_sum[:, 0:D]
    max_ctx = row_max[:, 0:D]
    for j in range(1, k):                               # fold the k lane groups
        avg_ctx = avg_ctx + row_sum[:, j * D:(j + 1) * D]
        max_ctx = jnp.maximum(max_ctx, row_max[:, j * D:(j + 1) * D])
    avg_ctx = avg_ctx * (1.0 / N)

    # context_net as two lane-dense matmuls against the avg / max weight halves
    off_flat = (jnp.dot(avg_ctx.astype(bf16), wca_ref[...],
                        preferred_element_type=f32)
                + jnp.dot(max_ctx.astype(bf16), wcm_ref[...],
                          preferred_element_type=f32)
                + bctx_ref[...])                        # (Bt, E*D) f32

    # Un-flatten the prototype offsets once per grid step.  E static lane
    # slices of a tiny (Bt, E*D) tensor — kept over a lane-splitting reshape
    # for lowering safety (layout tax is bounded per step, not per batch elt).
    for e in range(E):
        off_scr[:, e, :] = off_flat[:, e * D:(e + 1) * D].astype(bf16)

    # -------- pre_head_proj on the packed slab (block-diagonal W, K = L) ----
    xp_p2 = (jnp.dot(x_p2_bf, wpre_ref[...], preferred_element_type=f32)
             + bpre_ref[...])                           # (Bt*R, L)
    xp_p3 = xp_p2.reshape(Bt, R, L).astype(bf16)

    # -------- unpack X / X_proj to (Bt, N, D), group-major node order --------
    # The node axis is a fixed permutation of the original order; every
    # downstream op (softmax over all nodes, A^T X, A He) is permutation-
    # consistent, and we re-pack with the same permutation below.
    for j in range(k):
        xu_scr[:, j * R:(j + 1) * R, :] = x_p3[:, :, j * D:(j + 1) * D].astype(bf16)
        xpu_scr[:, j * R:(j + 1) * R, :] = xp_p3[:, :, j * D:(j + 1) * D]
    x_u = xu_scr[...]                                   # (Bt, N, D) bf16
    xp_u = xpu_scr[...]                                 # (Bt, N, D) bf16

    # -------- soft assignment logits: hoisted base + data-dependent offsets --
    logits_base = jnp.dot(xp_u.reshape(Bt * N, D), protot_ref[...],
                          preferred_element_type=f32).reshape(Bt, N, E)
    logits_off = jnp.einsum("bnd,bed->bne", xp_u, off_scr[...],
                            preferred_element_type=f32)
    logits = (logits_base + logits_off) * inv_scale     # (Bt, N, E)

    # dropout on logits: identity (eval mode)
    # TODO(synk): training-mode dropout would need pltpu.prng_* here.

    # softmax over the node axis (dim=1), numerically stabilized
    logits = logits - jnp.max(logits, axis=1, keepdims=True)
    p = jnp.exp(logits)
    inv_den = pl.reciprocal(jnp.sum(p, axis=1, keepdims=True), approx=False)
    A = (p * inv_den).astype(bf16)                      # (Bt, N, E)

    # -------- hypergraph message passing (batched einsums over the block) ----
    He = jnp.einsum("bne,bnd->bed", A, x_u, preferred_element_type=f32)
    He = _gelu_tanh(jnp.dot(He.reshape(Bt * E, D).astype(bf16), wedge_ref[...],
                            preferred_element_type=f32) + bedge_ref[...])
    He_bf = He.reshape(Bt, E, D).astype(bf16)
    Xn = jnp.einsum("bne,bed->bnd", A, He_bf, preferred_element_type=f32)

    # -------- re-pack node messages into the lane-dense layout (bf16) --------
    for j in range(k):
        xnp_scr[:, :, j * D:(j + 1) * D] = Xn[:, j * R:(j + 1) * R, :].astype(bf16)

    # -------- node_proj (block-diagonal, K = L) + gated residual -------------
    y_p = _gelu_tanh(jnp.dot(xnp_scr[...].reshape(Bt * R, L), wnode_ref[...],
                             preferred_element_type=f32) + bnode_ref[...])
    out_ref[...] = (x_p2 + gate_ref[0, 0] * y_p).reshape(Bt, R, L).astype(out_ref.dtype)


def soft_hgnn_forward(x, params, *, num_hyperedges, num_heads, block_b=None):
    B, N, D = x.shape
    E = num_hyperedges
    assert D % num_heads == 0, "embed_dim must be divisible by num_heads"
    head_dim = D // num_heads
    inv_scale = 1.0 / (num_heads * math.sqrt(head_dim))

    # Lane packing: k = 128 // D nodes per 128-lane row so X/out DMAs, the
    # pre_head_proj / node_proj GEMMs (kron(I_k, W) block-diagonal weights)
    # and the final store are lane-dense.
    if D < 128 and 128 % D == 0:
        k = 128 // D
        while N % k:
            k //= 2
    else:
        k = 1
    R, L = N // k, k * D

    # Batch block per grid step: target ~1024 flattened rows, keep grid >= 2
    # (v7x has 2 TensorCores); pad B instead of shrinking block_b.
    if block_b is None:
        block_b = max(1, min(B, max(1, 1024 // N)))
        if B >= 2:
            block_b = min(block_b, max(1, B // 2))
    B_pad = ((B + block_b - 1) // block_b) * block_b
    if B_pad != B:
        x = jnp.concatenate([x, jnp.zeros((B_pad - B, N, D), x.dtype)], axis=0)
    x_p = x.reshape(B_pad, R, L)        # contiguous, free reinterpretation
    grid = (B_pad // block_b,)

    f32, bf16 = jnp.float32, jnp.bfloat16
    eye_k = jnp.eye(k, dtype=f32)

    # --- plain-JAX glue: parameter layout prep (done once, outside the kernel)
    wc = params["w_ctx"]                                     # (E*D, 2*D)
    wca = wc[:, :D].T.astype(bf16)                           # (D, E*D) avg half
    wcm = wc[:, D:].T.astype(bf16)                           # (D, E*D) max half
    bctx = params["b_ctx"].reshape(1, E * D).astype(f32)
    protot = params["proto"].T.astype(bf16)                  # (D, E) pre-transposed
    wpre = jnp.kron(eye_k, params["w_pre"].T).astype(bf16)   # (L, L) block-diag
    bpre = jnp.tile(params["b_pre"], k).reshape(1, L).astype(f32)
    wedge = params["w_edge"].T.astype(bf16)                  # (D, D)
    bedge = params["b_edge"].reshape(1, D).astype(f32)
    wnode = jnp.kron(eye_k, params["w_node"].T).astype(bf16) # (L, L) block-diag
    bnode = jnp.tile(params["b_node"], k).reshape(1, L).astype(f32)
    gate = params["gate"].reshape(1, 1).astype(f32)

    kernel = partial(_soft_hgnn_kernel, inv_scale=inv_scale)

    def rep(shape):
        return pl.BlockSpec(shape, lambda i: (0,) * len(shape))

    grid_spec = pltpu.PrefetchScalarGridSpec(
        num_scalar_prefetch=0,
        grid=grid,
        in_specs=[
            pl.BlockSpec((block_b, R, L), lambda i: (i, 0, 0)),   # X (packed)
            rep((D, E)),                        # prototype_base^T      (bf16)
            rep((D, E * D)),                    # context_net W, avg    (bf16)
            rep((D, E * D)),                    # context_net W, max    (bf16)
            rep((1, E * D)),                    # context_net bias      (f32)
            rep((L, L)), rep((1, L)),           # pre_head_proj (block-diag)
            rep((D, D)), rep((1, D)),           # edge_proj
            rep((L, L)), rep((1, L)),           # node_proj (block-diag)
            pl.BlockSpec((1, 1), lambda i: (0, 0),
                         memory_space=pltpu.MemorySpace.SMEM),    # gate scalar
        ],
        out_specs=pl.BlockSpec((block_b, R, L), lambda i: (i, 0, 0)),
        scratch_shapes=[
            pltpu.VMEM((block_b, E, D), bf16),      # prototype offsets
            pltpu.VMEM((block_b, N, D), bf16),      # unpacked X
            pltpu.VMEM((block_b, N, D), bf16),      # unpacked X_proj
            pltpu.VMEM((block_b, R, L), bf16),      # packed node messages
        ],
    )

    out_p = pl.pallas_call(
        kernel,
        out_shape=jax.ShapeDtypeStruct((B_pad, R, L), x.dtype),
        grid_spec=grid_spec,
        compiler_params=pltpu.CompilerParams(
            dimension_semantics=("parallel",),
            vmem_limit_bytes=32 * 1024 * 1024),
    )(x_p, protot, wca, wcm, bctx, wpre, bpre, wedge, bedge, wnode, bnode, gate)

    return out_p.reshape(B_pad, N, D)[:B]


def soft_hgnn_reference(x, params, *, num_hyperedges, num_heads):
    # pure-JAX mirror of the PyTorch forward (eval mode), for validation
    B, N, D = x.shape
    E, H = num_hyperedges, num_heads
    hd = D // H
    with jax.default_matmul_precision("highest"):
        avg = x.mean(axis=1)
        mx = x.max(axis=1)
        ctx = jnp.concatenate([avg, mx], axis=-1)
        off = (ctx @ params["w_ctx"].T + params["b_ctx"]).reshape(B, E, D)
        protos = params["proto"][None] + off
        xp = x @ params["w_pre"].T + params["b_pre"]
        xh = xp.reshape(B, N, H, hd).transpose(0, 2, 1, 3)
        ph = protos.reshape(B, E, H, hd).transpose(0, 2, 1, 3)
        logits = jnp.einsum("bhnd,bhed->bhne", xh, ph) / math.sqrt(hd)
        logits = logits.mean(axis=1)
        A = jax.nn.softmax(logits, axis=1)
        He = jnp.einsum("bne,bnd->bed", A, x)
        He = jax.nn.gelu(He @ params["w_edge"].T + params["b_edge"], approximate=False)
        Xn = jnp.einsum("bne,bed->bnd", A, He)
        Xn = jax.nn.gelu(Xn @ params["w_node"].T + params["b_node"], approximate=False)
        return x + params["gate"] * Xn


if __name__ == "__main__":
    B, N, D = 2, 64, 32          # batch, nodes, embed_dim
    E, H = 16, 4                 # num_hyperedges, num_heads

    key = jax.random.PRNGKey(0)
    ks = jax.random.split(key, 10)

    def init(k, shape, scale=0.1):
        return scale * jax.random.normal(k, shape, dtype=jnp.float32)

    params = {
        "proto":  init(ks[0], (E, D)),
        "w_ctx":  init(ks[1], (E * D, 2 * D)),
        "b_ctx":  init(ks[2], (E * D,)),
        "w_pre":  init(ks[3], (D, D)),
        "b_pre":  init(ks[4], (D,)),
        "w_edge": init(ks[5], (D, D)),
        "b_edge": init(ks[6], (D,)),
        "w_node": init(ks[7], (D, D)),
        "b_node": init(ks[8], (D,)),
        "gate":   jnp.array(1.0, dtype=jnp.float32),
    }
    x = jax.random.normal(ks[9], (B, N, D), dtype=jnp.float32)

    out = soft_hgnn_forward(x, params, num_hyperedges=E, num_heads=H)
    jax.block_until_ready(out)
    assert out.shape == (B, N, D) and out.dtype == jnp.float32

    ref = soft_hgnn_reference(x, params, num_hyperedges=E, num_heads=H)
    max_diff = float(jnp.max(jnp.abs(out - ref)))
    assert max_diff < 1e-2, f"mismatch vs reference: {max_diff}"

    print("KERNEL_OK")
</pallas_src>

<mosaic_0001>
module attributes {stable_mosaic.version = 11 : i64} {
  func.func @_soft_hgnn_kernel(%arg0: i32, %arg1: memref<1x16x128xf32, #tpu.memory_space<vmem>>, %arg2: memref<32x16xbf16, #tpu.memory_space<vmem>>, %arg3: memref<32x512xbf16, #tpu.memory_space<vmem>>, %arg4: memref<32x512xbf16, #tpu.memory_space<vmem>>, %arg5: memref<1x512xf32, #tpu.memory_space<vmem>>, %arg6: memref<128x128xbf16, #tpu.memory_space<vmem>>, %arg7: memref<1x128xf32, #tpu.memory_space<vmem>>, %arg8: memref<32x32xbf16, #tpu.memory_space<vmem>>, %arg9: memref<1x32xf32, #tpu.memory_space<vmem>>, %arg10: memref<128x128xbf16, #tpu.memory_space<vmem>>, %arg11: memref<1x128xf32, #tpu.memory_space<vmem>>, %arg12: memref<1x1xf32, #tpu.memory_space<smem>>, %arg13: memref<1x16x128xf32, #tpu.memory_space<vmem>>, %arg14: memref<1x16x32xbf16, #tpu.memory_space<vmem>>, %arg15: memref<1x64x32xbf16, #tpu.memory_space<vmem>>, %arg16: memref<1x64x32xbf16, #tpu.memory_space<vmem>>, %arg17: memref<1x16x128xbf16, #tpu.memory_space<vmem>>) attributes {dimension_semantics = [#tpu.dimension_semantics<parallel>], iteration_bounds = array<i64: 2>, scalar_prefetch = 0 : i64, scratch_operands = 4 : i64, tpu.core_type = #tpu.core_type<tc>, window_params = [{transform_indices = @transform_0, window_bounds = array<i64: 1, 16, 128>}, {pipeline_mode = #tpu.pipeline_mode<synchronous>, transform_indices = @transform_1, window_bounds = array<i64: 32, 16>}, {pipeline_mode = #tpu.pipeline_mode<synchronous>, transform_indices = @transform_2, window_bounds = array<i64: 32, 512>}, {pipeline_mode = #tpu.pipeline_mode<synchronous>, transform_indices = @transform_3, window_bounds = array<i64: 32, 512>}, {pipeline_mode = #tpu.pipeline_mode<synchronous>, transform_indices = @transform_4, window_bounds = array<i64: 1, 512>}, {pipeline_mode = #tpu.pipeline_mode<synchronous>, transform_indices = @transform_5, window_bounds = array<i64: 128, 128>}, {pipeline_mode = #tpu.pipeline_mode<synchronous>, transform_indices = @transform_6, window_bounds = array<i64: 1, 128>}, {pipeline_mode = #tpu.pipeline_mode<synchronous>, transform_indices = @transform_7, window_bounds = array<i64: 32, 32>}, {pipeline_mode = #tpu.pipeline_mode<synchronous>, transform_indices = @transform_8, window_bounds = array<i64: 1, 32>}, {pipeline_mode = #tpu.pipeline_mode<synchronous>, transform_indices = @transform_9, window_bounds = array<i64: 128, 128>}, {pipeline_mode = #tpu.pipeline_mode<synchronous>, transform_indices = @transform_10, window_bounds = array<i64: 1, 128>}, {transform_indices = @transform_11, window_bounds = array<i64: 1, 1>}, {transform_indices = @transform_12, window_bounds = array<i64: 1, 16, 128>}]} {
    %c0 = arith.constant 0 : index
    %c0_0 = arith.constant 0 : index
    %c0_1 = arith.constant 0 : index
    %0 = vector.load %arg1[%c0, %c0_0, %c0_1] : memref<1x16x128xf32, #tpu.memory_space<vmem>>, vector<1x16x128xf32>
    %1 = vector.shape_cast %0 : vector<1x16x128xf32> to vector<16x128xf32>
    %2 = arith.truncf %1 : vector<16x128xf32> to vector<16x128xbf16>
    %cst = arith.constant dense<0.000000e+00> : vector<1x128xf32>
    %3 = vector.multi_reduction <add>, %0, %cst [1] : vector<1x16x128xf32> to vector<1x128xf32>
    %cst_2 = arith.constant dense<0xFF800000> : vector<1x128xf32>
    %4 = vector.multi_reduction <maximumf>, %0, %cst_2 [1] : vector<1x16x128xf32> to vector<1x128xf32>
    %5 = vector.extract_strided_slice %3 {offsets = [0, 0], sizes = [1, 32], strides = [1, 1]} : vector<1x128xf32> to vector<1x32xf32>
    %6 = vector.extract_strided_slice %4 {offsets = [0, 0], sizes = [1, 32], strides = [1, 1]} : vector<1x128xf32> to vector<1x32xf32>
    %7 = vector.extract_strided_slice %3 {offsets = [0, 32], sizes = [1, 32], strides = [1, 1]} : vector<1x128xf32> to vector<1x32xf32>
    %8 = arith.addf %5, %7 : vector<1x32xf32>
    %9 = vector.extract_strided_slice %4 {offsets = [0, 32], sizes = [1, 32], strides = [1, 1]} : vector<1x128xf32> to vector<1x32xf32>
    %10 = arith.maximumf %6, %9 : vector<1x32xf32>
    %11 = vector.extract_strided_slice %3 {offsets = [0, 64], sizes = [1, 32], strides = [1, 1]} : vector<1x128xf32> to vector<1x32xf32>
    %12 = arith.addf %8, %11 : vector<1x32xf32>
    %13 = vector.extract_strided_slice %4 {offsets = [0, 64], sizes = [1, 32], strides = [1, 1]} : vector<1x128xf32> to vector<1x32xf32>
    %14 = arith.maximumf %10, %13 : vector<1x32xf32>
    %15 = vector.extract_strided_slice %3 {offsets = [0, 96], sizes = [1, 32], strides = [1, 1]} : vector<1x128xf32> to vector<1x32xf32>
    %16 = arith.addf %12, %15 : vector<1x32xf32>
    %17 = vector.extract_strided_slice %4 {offsets = [0, 96], sizes = [1, 32], strides = [1, 1]} : vector<1x128xf32> to vector<1x32xf32>
    %18 = arith.maximumf %14, %17 : vector<1x32xf32>
    %cst_3 = arith.constant 1.562500e-02 : f32
    %19 = vector.broadcast %cst_3 : f32 to vector<1x32xf32>
    %20 = arith.mulf %16, %19 : vector<1x32xf32>
    %21 = arith.truncf %20 : vector<1x32xf32> to vector<1x32xbf16>
    %c0_4 = arith.constant 0 : index
    %c0_5 = arith.constant 0 : index
    %22 = vector.load %arg3[%c0_4, %c0_5] : memref<32x512xbf16, #tpu.memory_space<vmem>>, vector<32x512xbf16>
    %cst_6 = arith.constant dense<0.000000e+00> : vector<1x512xf32>
    %23 = tpu.matmul %21, %22, %cst_6 {dimension_numbers = #tpu.dot_dimension_numbers<[1], [0], [0], [1], [0, 0, 1, 1], [], []>} : vector<1x32xbf16>, vector<32x512xbf16>, vector<1x512xf32> -> vector<1x512xf32>
    %24 = arith.truncf %18 : vector<1x32xf32> to vector<1x32xbf16>
    %c0_7 = arith.constant 0 : index
    %c0_8 = arith.constant 0 : index
    %25 = vector.load %arg4[%c0_7, %c0_8] : memref<32x512xbf16, #tpu.memory_space<vmem>>, vector<32x512xbf16>
    %cst_9 = arith.constant dense<0.000000e+00> : vector<1x512xf32>
    %26 = tpu.matmul %24, %25, %cst_9 {dimension_numbers = #tpu.dot_dimension_numbers<[1], [0], [0], [1], [0, 0, 1, 1], [], []>} : vector<1x32xbf16>, vector<32x512xbf16>, vector<1x512xf32> -> vector<1x512xf32>
    %27 = arith.addf %23, %26 : vector<1x512xf32>
    %c0_10 = arith.constant 0 : index
    %c0_11 = arith.constant 0 : index
    %28 = vector.load %arg5[%c0_10, %c0_11] : memref<1x512xf32, #tpu.memory_space<vmem>>, vector<1x512xf32>
    %29 = arith.addf %27, %28 : vector<1x512xf32>
    %30 = vector.extract_strided_slice %29 {offsets = [0, 0], sizes = [1, 32], strides = [1, 1]} : vector<1x512xf32> to vector<1x32xf32>
    %31 = arith.truncf %30 : vector<1x32xf32> to vector<1x32xbf16>
    %c0_12 = arith.constant 0 : index
    %c0_13 = arith.constant 0 : index
    %c0_14 = arith.constant 0 : index
    %32 = vector.load %arg14[%c0_12, %c0_13, %c0_14] : memref<1x16x32xbf16, #tpu.memory_space<vmem>>, vector<1x1x32xbf16>
    %33 = vector.shape_cast %32 : vector<1x1x32xbf16> to vector<1x32xbf16>
    %34 = vector.shape_cast %31 : vector<1x32xbf16> to vector<1x1x32xbf16>
    tpu.vector_store %arg14[%c0_12, %c0_13, %c0_14], %34 {strides = array<i32>} : memref<1x16x32xbf16, #tpu.memory_space<vmem>>, vector<1x1x32xbf16>,
    %35 = vector.extract_strided_slice %29 {offsets = [0, 32], sizes = [1, 32], strides = [1, 1]} : vector<1x512xf32> to vector<1x32xf32>
    %36 = arith.truncf %35 : vector<1x32xf32> to vector<1x32xbf16>
    %c0_15 = arith.constant 0 : index
    %c1 = arith.constant 1 : index
    %c0_16 = arith.constant 0 : index
    %37 = vector.load %arg14[%c0_15, %c1, %c0_16] : memref<1x16x32xbf16, #tpu.memory_space<vmem>>, vector<1x1x32xbf16>
    %38 = vector.shape_cast %37 : vector<1x1x32xbf16> to vector<1x32xbf16>
    %39 = vector.shape_cast %36 : vector<1x32xbf16> to vector<1x1x32xbf16>
    tpu.vector_store %arg14[%c0_15, %c1, %c0_16], %39 {strides = array<i32>} : memref<1x16x32xbf16, #tpu.memory_space<vmem>>, vector<1x1x32xbf16>,
    %40 = vector.extract_strided_slice %29 {offsets = [0, 64], sizes = [1, 32], strides = [1, 1]} : vector<1x512xf32> to vector<1x32xf32>
    %41 = arith.truncf %40 : vector<1x32xf32> to vector<1x32xbf16>
    %c0_17 = arith.constant 0 : index
    %c2 = arith.constant 2 : index
    %c0_18 = arith.constant 0 : index
    %42 = vector.load %arg14[%c0_17, %c2, %c0_18] : memref<1x16x32xbf16, #tpu.memory_space<vmem>>, vector<1x1x32xbf16>
    %43 = vector.shape_cast %42 : vector<1x1x32xbf16> to vector<1x32xbf16>
    %44 = vector.shape_cast %41 : vector<1x32xbf16> to vector<1x1x32xbf16>
    tpu.vector_store %arg14[%c0_17, %c2, %c0_18], %44 {strides = array<i32>} : memref<1x16x32xbf16, #tpu.memory_space<vmem>>, vector<1x1x32xbf16>,
    %45 = vector.extract_strided_slice %29 {offsets = [0, 96], sizes = [1, 32], strides = [1, 1]} : vector<1x512xf32> to vector<1x32xf32>
    %46 = arith.truncf %45 : vector<1x32xf32> to vector<1x32xbf16>
    %c0_19 = arith.constant 0 : index
    %c3 = arith.constant 3 : index
    %c0_20 = arith.constant 0 : index
    %47 = vector.load %arg14[%c0_19, %c3, %c0_20] : memref<1x16x32xbf16, #tpu.memory_space<vmem>>, vector<1x1x32xbf16>
    %48 = vector.shape_cast %47 : vector<1x1x32xbf16> to vector<1x32xbf16>
    %49 = vector.shape_cast %46 : vector<1x32xbf16> to vector<1x1x32xbf16>
    tpu.vector_store %arg14[%c0_19, %c3, %c0_20], %49 {strides = array<i32>} : memref<1x16x32xbf16, #tpu.memory_space<vmem>>, vector<1x1x32xbf16>,
    %50 = vector.extract_strided_slice %29 {offsets = [0, 128], sizes = [1, 32], strides = [1, 1]} : vector<1x512xf32> to vector<1x32xf32>
    %51 = arith.truncf %50 : vector<1x32xf32> to vector<1x32xbf16>
    %c0_21 = arith.constant 0 : index
    %c4 = arith.constant 4 : index
    %c0_22 = arith.constant 0 : index
    %52 = vector.load %arg14[%c0_21, %c4, %c0_22] : memref<1x16x32xbf16, #tpu.memory_space<vmem>>, vector<1x1x32xbf16>
    %53 = vector.shape_cast %52 : vector<1x1x32xbf16> to vector<1x32xbf16>
    %54 = vector.shape_cast %51 : vector<1x32xbf16> to vector<1x1x32xbf16>
    tpu.vector_store %arg14[%c0_21, %c4, %c0_22], %54 {strides = array<i32>} : memref<1x16x32xbf16, #tpu.memory_space<vmem>>, vector<1x1x32xbf16>,
    %55 = vector.extract_strided_slice %29 {offsets = [0, 160], sizes = [1, 32], strides = [1, 1]} : vector<1x512xf32> to vector<1x32xf32>
    %56 = arith.truncf %55 : vector<1x32xf32> to vector<1x32xbf16>
    %c0_23 = arith.constant 0 : index
    %c5 = arith.constant 5 : index
    %c0_24 = arith.constant 0 : index
    %57 = vector.load %arg14[%c0_23, %c5, %c0_24] : memref<1x16x32xbf16, #tpu.memory_space<vmem>>, vector<1x1x32xbf16>
    %58 = vector.shape_cast %57 : vector<1x1x32xbf16> to vector<1x32xbf16>
    %59 = vector.shape_cast %56 : vector<1x32xbf16> to vector<1x1x32xbf16>
    tpu.vector_store %arg14[%c0_23, %c5, %c0_24], %59 {strides = array<i32>} : memref<1x16x32xbf16, #tpu.memory_space<vmem>>, vector<1x1x32xbf16>,
    %60 = vector.extract_strided_slice %29 {offsets = [0, 192], sizes = [1, 32], strides = [1, 1]} : vector<1x512xf32> to vector<1x32xf32>
    %61 = arith.truncf %60 : vector<1x32xf32> to vector<1x32xbf16>
    %c0_25 = arith.constant 0 : index
    %c6 = arith.constant 6 : index
    %c0_26 = arith.constant 0 : index
    %62 = vector.load %arg14[%c0_25, %c6, %c0_26] : memref<1x16x32xbf16, #tpu.memory_space<vmem>>, vector<1x1x32xbf16>
    %63 = vector.shape_cast %62 : vector<1x1x32xbf16> to vector<1x32xbf16>
    %64 = vector.shape_cast %61 : vector<1x32xbf16> to vector<1x1x32xbf16>
    tpu.vector_store %arg14[%c0_25, %c6, %c0_26], %64 {strides = array<i32>} : memref<1x16x32xbf16, #tpu.memory_space<vmem>>, vector<1x1x32xbf16>,
    %65 = vector.extract_strided_slice %29 {offsets = [0, 224], sizes = [1, 32], strides = [1, 1]} : vector<1x512xf32> to vector<1x32xf32>
    %66 = arith.truncf %65 : vector<1x32xf32> to vector<1x32xbf16>
    %c0_27 = arith.constant 0 : index
    %c7 = arith.constant 7 : index
    %c0_28 = arith.constant 0 : index
    %67 = vector.load %arg14[%c0_27, %c7, %c0_28] : memref<1x16x32xbf16, #tpu.memory_space<vmem>>, vector<1x1x32xbf16>
    %68 = vector.shape_cast %67 : vector<1x1x32xbf16> to vector<1x32xbf16>
    %69 = vector.shape_cast %66 : vector<1x32xbf16> to vector<1x1x32xbf16>
    tpu.vector_store %arg14[%c0_27, %c7, %c0_28], %69 {strides = array<i32>} : memref<1x16x32xbf16, #tpu.memory_space<vmem>>, vector<1x1x32xbf16>,
    %70 = vector.extract_strided_slice %29 {offsets = [0, 256], sizes = [1, 32], strides = [1, 1]} : vector<1x512xf32> to vector<1x32xf32>
    %71 = arith.truncf %70 : vector<1x32xf32> to vector<1x32xbf16>
    %c0_29 = arith.constant 0 : index
    %c8 = arith.constant 8 : index
    %c0_30 = arith.constant 0 : index
    %72 = vector.load %arg14[%c0_29, %c8, %c0_30] : memref<1x16x32xbf16, #tpu.memory_space<vmem>>, vector<1x1x32xbf16>
    %73 = vector.shape_cast %72 : vector<1x1x32xbf16> to vector<1x32xbf16>
    %74 = vector.shape_cast %71 : vector<1x32xbf16> to vector<1x1x32xbf16>
    tpu.vector_store %arg14[%c0_29, %c8, %c0_30], %74 {strides = array<i32>} : memref<1x16x32xbf16, #tpu.memory_space<vmem>>, vector<1x1x32xbf16>,
    %75 = vector.extract_strided_slice %29 {offsets = [0, 288], sizes = [1, 32], strides = [1, 1]} : vector<1x512xf32> to vector<1x32xf32>
    %76 = arith.truncf %75 : vector<1x32xf32> to vector<1x32xbf16>
    %c0_31 = arith.constant 0 : index
    %c9 = arith.constant 9 : index
    %c0_32 = arith.constant 0 : index
    %77 = vector.load %arg14[%c0_31, %c9, %c0_32] : memref<1x16x32xbf16, #tpu.memory_space<vmem>>, vector<1x1x32xbf16>
    %78 = vector.shape_cast %77 : vector<1x1x32xbf16> to vector<1x32xbf16>
    %79 = vector.shape_cast %76 : vector<1x32xbf16> to vector<1x1x32xbf16>
    tpu.vector_store %arg14[%c0_31, %c9, %c0_32], %79 {strides = array<i32>} : memref<1x16x32xbf16, #tpu.memory_space<vmem>>, vector<1x1x32xbf16>,
    %80 = vector.extract_strided_slice %29 {offsets = [0, 320], sizes = [1, 32], strides = [1, 1]} : vector<1x512xf32> to vector<1x32xf32>
    %81 = arith.truncf %80 : vector<1x32xf32> to vector<1x32xbf16>
    %c0_33 = arith.constant 0 : index
    %c10 = arith.constant 10 : index
    %c0_34 = arith.constant 0 : index
    %82 = vector.load %arg14[%c0_33, %c10, %c0_34] : memref<1x16x32xbf16, #tpu.memory_space<vmem>>, vector<1x1x32xbf16>
    %83 = vector.shape_cast %82 : vector<1x1x32xbf16> to vector<1x32xbf16>
    %84 = vector.shape_cast %81 : vector<1x32xbf16> to vector<1x1x32xbf16>
    tpu.vector_store %arg14[%c0_33, %c10, %c0_34], %84 {strides = array<i32>} : memref<1x16x32xbf16, #tpu.memory_space<vmem>>, vector<1x1x32xbf16>,
    %85 = vector.extract_strided_slice %29 {offsets = [0, 352], sizes = [1, 32], strides = [1, 1]} : vector<1x512xf32> to vector<1x32xf32>
    %86 = arith.truncf %85 : vector<1x32xf32> to vector<1x32xbf16>
    %c0_35 = arith.constant 0 : index
    %c11 = arith.constant 11 : index
    %c0_36 = arith.constant 0 : index
    %87 = vector.load %arg14[%c0_35, %c11, %c0_36] : memref<1x16x32xbf16, #tpu.memory_space<vmem>>, vector<1x1x32xbf16>
    %88 = vector.shape_cast %87 : vector<1x1x32xbf16> to vector<1x32xbf16>
    %89 = vector.shape_cast %86 : vector<1x32xbf16> to vector<1x1x32xbf16>
    tpu.vector_store %arg14[%c0_35, %c11, %c0_36], %89 {strides = array<i32>} : memref<1x16x32xbf16, #tpu.memory_space<vmem>>, vector<1x1x32xbf16>,
    %90 = vector.extract_strided_slice %29 {offsets = [0, 384], sizes = [1, 32], strides = [1, 1]} : vector<1x512xf32> to vector<1x32xf32>
    %91 = arith.truncf %90 : vector<1x32xf32> to vector<1x32xbf16>
    %c0_37 = arith.constant 0 : index
    %c12 = arith.constant 12 : index
    %c0_38 = arith.constant 0 : index
    %92 = vector.load %arg14[%c0_37, %c12, %c0_38] : memref<1x16x32xbf16, #tpu.memory_space<vmem>>, vector<1x1x32xbf16>
    %93 = vector.shape_cast %92 : vector<1x1x32xbf16> to vector<1x32xbf16>
    %94 = vector.shape_cast %91 : vector<1x32xbf16> to vector<1x1x32xbf16>
    tpu.vector_store %arg14[%c0_37, %c12, %c0_38], %94 {strides = array<i32>} : memref<1x16x32xbf16, #tpu.memory_space<vmem>>, vector<1x1x32xbf16>,
    %95 = vector.extract_strided_slice %29 {offsets = [0, 416], sizes = [1, 32], strides = [1, 1]} : vector<1x512xf32> to vector<1x32xf32>
    %96 = arith.truncf %95 : vector<1x32xf32> to vector<1x32xbf16>
    %c0_39 = arith.constant 0 : index
    %c13 = arith.constant 13 : index
    %c0_40 = arith.constant 0 : index
    %97 = vector.load %arg14[%c0_39, %c13, %c0_40] : memref<1x16x32xbf16, #tpu.memory_space<vmem>>, vector<1x1x32xbf16>
    %98 = vector.shape_cast %97 : vector<1x1x32xbf16> to vector<1x32xbf16>
    %99 = vector.shape_cast %96 : vector<1x32xbf16> to vector<1x1x32xbf16>
    tpu.vector_store %arg14[%c0_39, %c13, %c0_40], %99 {strides = array<i32>} : memref<1x16x32xbf16, #tpu.memory_space<vmem>>, vector<1x1x32xbf16>,
    %100 = vector.extract_strided_slice %29 {offsets = [0, 448], sizes = [1, 32], strides = [1, 1]} : vector<1x512xf32> to vector<1x32xf32>
    %101 = arith.truncf %100 : vector<1x32xf32> to vector<1x32xbf16>
    %c0_41 = arith.constant 0 : index
    %c14 = arith.constant 14 : index
    %c0_42 = arith.constant 0 : index
    %102 = vector.load %arg14[%c0_41, %c14, %c0_42] : memref<1x16x32xbf16, #tpu.memory_space<vmem>>, vector<1x1x32xbf16>
    %103 = vector.shape_cast %102 : vector<1x1x32xbf16> to vector<1x32xbf16>
    %104 = vector.shape_cast %101 : vector<1x32xbf16> to vector<1x1x32xbf16>
    tpu.vector_store %arg14[%c0_41, %c14, %c0_42], %104 {strides = array<i32>} : memref<1x16x32xbf16, #tpu.memory_space<vmem>>, vector<1x1x32xbf16>,
    %105 = vector.extract_strided_slice %29 {offsets = [0, 480], sizes = [1, 32], strides = [1, 1]} : vector<1x512xf32> to vector<1x32xf32>
    %106 = arith.truncf %105 : vector<1x32xf32> to vector<1x32xbf16>
    %c0_43 = arith.constant 0 : index
    %c15 = arith.constant 15 : index
    %c0_44 = arith.constant 0 : index
    %107 = vector.load %arg14[%c0_43, %c15, %c0_44] : memref<1x16x32xbf16, #tpu.memory_space<vmem>>, vector<1x1x32xbf16>
    %108 = vector.shape_cast %107 : vector<1x1x32xbf16> to vector<1x32xbf16>
    %109 = vector.shape_cast %106 : vector<1x32xbf16> to vector<1x1x32xbf16>
    tpu.vector_store %arg14[%c0_43, %c15, %c0_44], %109 {strides = array<i32>} : memref<1x16x32xbf16, #tpu.memory_space<vmem>>, vector<1x1x32xbf16>,
    %c0_45 = arith.constant 0 : index
    %c0_46 = arith.constant 0 : index
    %110 = vector.load %arg6[%c0_45, %c0_46] : memref<128x128xbf16, #tpu.memory_space<vmem>>, vector<128x128xbf16>
    %cst_47 = arith.constant dense<0.000000e+00> : vector<16x128xf32>
    %111 = tpu.matmul %2, %110, %cst_47 {dimension_numbers = #tpu.dot_dimension_numbers<[1], [0], [0], [1], [0, 0, 1, 1], [], []>} : vector<16x128xbf16>, vector<128x128xbf16>, vector<16x128xf32> -> vector<16x128xf32>
    %c0_48 = arith.constant 0 : index
    %c0_49 = arith.constant 0 : index
    %112 = vector.load %arg7[%c0_48, %c0_49] : memref<1x128xf32, #tpu.memory_space<vmem>>, vector<1x128xf32>
    %113 = vector.broadcast %112 : vector<1x128xf32> to vector<16x128xf32>
    %114 = arith.addf %111, %113 : vector<16x128xf32>
    %115 = vector.shape_cast %114 : vector<16x128xf32> to vector<1x16x128xf32>
    %116 = arith.truncf %115 : vector<1x16x128xf32> to vector<1x16x128xbf16>
    %117 = vector.extract_strided_slice %0 {offsets = [0, 0, 0], sizes = [1, 16, 32], strides = [1, 1, 1]} : vector<1x16x128xf32> to vector<1x16x32xf32>
    %118 = arith.truncf %117 : vector<1x16x32xf32> to vector<1x16x32xbf16>
    %c0_50 = arith.constant 0 : index
    %c0_51 = arith.constant 0 : index
    %c0_52 = arith.constant 0 : index
    %119 = vector.load %arg15[%c0_50, %c0_51, %c0_52] : memref<1x64x32xbf16, #tpu.memory_space<vmem>>, vector<1x16x32xbf16>
    tpu.vector_store %arg15[%c0_50, %c0_51, %c0_52], %118 {strides = array<i32>} : memref<1x64x32xbf16, #tpu.memory_space<vmem>>, vector<1x16x32xbf16>,
    %120 = vector.extract_strided_slice %116 {offsets = [0, 0, 0], sizes = [1, 16, 32], strides = [1, 1, 1]} : vector<1x16x128xbf16> to vector<1x16x32xbf16>
    %c0_53 = arith.constant 0 : index
    %c0_54 = arith.constant 0 : index
    %c0_55 = arith.constant 0 : index
    %121 = vector.load %arg16[%c0_53, %c0_54, %c0_55] : memref<1x64x32xbf16, #tpu.memory_space<vmem>>, vector<1x16x32xbf16>
    tpu.vector_store %arg16[%c0_53, %c0_54, %c0_55], %120 {strides = array<i32>} : memref<1x64x32xbf16, #tpu.memory_space<vmem>>, vector<1x16x32xbf16>,
    %122 = vector.extract_strided_slice %0 {offsets = [0, 0, 32], sizes = [1, 16, 32], strides = [1, 1, 1]} : vector<1x16x128xf32> to vector<1x16x32xf32>
    %123 = arith.truncf %122 : vector<1x16x32xf32> to vector<1x16x32xbf16>
    %c0_56 = arith.constant 0 : index
    %c16 = arith.constant 16 : index
    %c0_57 = arith.constant 0 : index
    %124 = vector.load %arg15[%c0_56, %c16, %c0_57] : memref<1x64x32xbf16, #tpu.memory_space<vmem>>, vector<1x16x32xbf16>
    tpu.vector_store %arg15[%c0_56, %c16, %c0_57], %123 {strides = array<i32>} : memref<1x64x32xbf16, #tpu.memory_space<vmem>>, vector<1x16x32xbf16>,
    %125 = vector.extract_strided_slice %116 {offsets = [0, 0, 32], sizes = [1, 16, 32], strides = [1, 1, 1]} : vector<1x16x128xbf16> to vector<1x16x32xbf16>
    %c0_58 = arith.constant 0 : index
    %c16_59 = arith.constant 16 : index
    %c0_60 = arith.constant 0 : index
    %126 = vector.load %arg16[%c0_58, %c16_59, %c0_60] : memref<1x64x32xbf16, #tpu.memory_space<vmem>>, vector<1x16x32xbf16>
    tpu.vector_store %arg16[%c0_58, %c16_59, %c0_60], %125 {strides = array<i32>} : memref<1x64x32xbf16, #tpu.memory_space<vmem>>, vector<1x16x32xbf16>,
    %127 = vector.extract_strided_slice %0 {offsets = [0, 0, 64], sizes = [1, 16, 32], strides = [1, 1, 1]} : vector<1x16x128xf32> to vector<1x16x32xf32>
    %128 = arith.truncf %127 : vector<1x16x32xf32> to vector<1x16x32xbf16>
    %c0_61 = arith.constant 0 : index
    %c32 = arith.constant 32 : index
    %c0_62 = arith.constant 0 : index
    %129 = vector.load %arg15[%c0_61, %c32, %c0_62] : memref<1x64x32xbf16, #tpu.memory_space<vmem>>, vector<1x16x32xbf16>
    tpu.vector_store %arg15[%c0_61, %c32, %c0_62], %128 {strides = array<i32>} : memref<1x64x32xbf16, #tpu.memory_space<vmem>>, vector<1x16x32xbf16>,
    %130 = vector.extract_strided_slice %116 {offsets = [0, 0, 64], sizes = [1, 16, 32], strides = [1, 1, 1]} : vector<1x16x128xbf16> to vector<1x16x32xbf16>
    %c0_63 = arith.constant 0 : index
    %c32_64 = arith.constant 32 : index
    %c0_65 = arith.constant 0 : index
    %131 = vector.load %arg16[%c0_63, %c32_64, %c0_65] : memref<1x64x32xbf16, #tpu.memory_space<vmem>>, vector<1x16x32xbf16>
    tpu.vector_store %arg16[%c0_63, %c32_64, %c0_65], %130 {strides = array<i32>} : memref<1x64x32xbf16, #tpu.memory_space<vmem>>, vector<1x16x32xbf16>,
    %132 = vector.extract_strided_slice %0 {offsets = [0, 0, 96], sizes = [1, 16, 32], strides = [1, 1, 1]} : vector<1x16x128xf32> to vector<1x16x32xf32>
    %133 = arith.truncf %132 : vector<1x16x32xf32> to vector<1x16x32xbf16>
    %c0_66 = arith.constant 0 : index
    %c48 = arith.constant 48 : index
    %c0_67 = arith.constant 0 : index
    %134 = vector.load %arg15[%c0_66, %c48, %c0_67] : memref<1x64x32xbf16, #tpu.memory_space<vmem>>, vector<1x16x32xbf16>
    tpu.vector_store %arg15[%c0_66, %c48, %c0_67], %133 {strides = array<i32>} : memref<1x64x32xbf16, #tpu.memory_space<vmem>>, vector<1x16x32xbf16>,
    %135 = vector.extract_strided_slice %116 {offsets = [0, 0, 96], sizes = [1, 16, 32], strides = [1, 1, 1]} : vector<1x16x128xbf16> to vector<1x16x32xbf16>
    %c0_68 = arith.constant 0 : index
    %c48_69 = arith.constant 48 : index
    %c0_70 = arith.constant 0 : index
    %136 = vector.load %arg16[%c0_68, %c48_69, %c0_70] : memref<1x64x32xbf16, #tpu.memory_space<vmem>>, vector<1x16x32xbf16>
    tpu.vector_store %arg16[%c0_68, %c48_69, %c0_70], %135 {strides = array<i32>} : memref<1x64x32xbf16, #tpu.memory_space<vmem>>, vector<1x16x32xbf16>,
    %c0_71 = arith.constant 0 : index
    %c0_72 = arith.constant 0 : index
    %c0_73 = arith.constant 0 : index
    %137 = vector.load %arg15[%c0_71, %c0_72, %c0_73] : memref<1x64x32xbf16, #tpu.memory_space<vmem>>, vector<1x64x32xbf16>
    %c0_74 = arith.constant 0 : index
    %c0_75 = arith.constant 0 : index
    %c0_76 = arith.constant 0 : index
    %138 = vector.load %arg16[%c0_74, %c0_75, %c0_76] : memref<1x64x32xbf16, #tpu.memory_space<vmem>>, vector<1x64x32xbf16>
    %139 = vector.shape_cast %138 : vector<1x64x32xbf16> to vector<64x32xbf16>
    %c0_77 = arith.constant 0 : index
    %c0_78 = arith.constant 0 : index
    %140 = vector.load %arg2[%c0_77, %c0_78] : memref<32x16xbf16, #tpu.memory_space<vmem>>, vector<32x16xbf16>
    %cst_79 = arith.constant dense<0.000000e+00> : vector<64x16xf32>
    %141 = tpu.matmul %139, %140, %cst_79 {dimension_numbers = #tpu.dot_dimension_numbers<[1], [0], [0], [1], [0, 0, 1, 1], [], []>} : vector<64x32xbf16>, vector<32x16xbf16>, vector<64x16xf32> -> vector<64x16xf32>
    %142 = vector.shape_cast %141 : vector<64x16xf32> to vector<1x64x16xf32>
    %c0_80 = arith.constant 0 : index
    %c0_81 = arith.constant 0 : index
    %c0_82 = arith.constant 0 : index
    %143 = vector.load %arg14[%c0_80, %c0_81, %c0_82] : memref<1x16x32xbf16, #tpu.memory_space<vmem>>, vector<1x16x32xbf16>
    "tpu.trace_start"() <{level = 10 : i32, message = "bnd,bed->bne"}> : () -> ()
    %cst_83 = arith.constant dense<0.000000e+00> : vector<1x64x16xf32>
    %144 = tpu.matmul %138, %143, %cst_83 {dimension_numbers = #tpu.dot_dimension_numbers<[2], [2], [1], [1], [0, 0, 0, 1, 1, 1], [0], [0]>} : vector<1x64x32xbf16>, vector<1x16x32xbf16>, vector<1x64x16xf32> -> vector<1x64x16xf32>
    "tpu.trace_stop"() : () -> ()
    %145 = arith.addf %142, %144 : vector<1x64x16xf32>
    %cst_84 = arith.constant 0.0883883461 : f32
    %146 = vector.broadcast %cst_84 : f32 to vector<1x64x16xf32>
    %147 = arith.mulf %145, %146 : vector<1x64x16xf32>
    %cst_85 = arith.constant dense<0xFF800000> : vector<1x16xf32>
    %148 = vector.multi_reduction <maximumf>, %147, %cst_85 [1] : vector<1x64x16xf32> to vector<1x16xf32>
    %149 = vector.shape_cast %148 : vector<1x16xf32> to vector<1x1x16xf32>
    %150 = vector.broadcast %149 : vector<1x1x16xf32> to vector<1x64x16xf32>
    %151 = arith.subf %147, %150 : vector<1x64x16xf32>
    %152 = math.exp %151 : vector<1x64x16xf32>
    %cst_86 = arith.constant dense<0.000000e+00> : vector<1x16xf32>
    %153 = vector.multi_reduction <add>, %152, %cst_86 [1] : vector<1x64x16xf32> to vector<1x16xf32>
    %154 = vector.shape_cast %153 : vector<1x16xf32> to vector<1x1x16xf32>
    %155 = tpu.reciprocal %154 : vector<1x1x16xf32> -> vector<1x1x16xf32>
    %156 = vector.broadcast %155 : vector<1x1x16xf32> to vector<1x64x16xf32>
    %157 = arith.mulf %152, %156 : vector<1x64x16xf32>
    %158 = arith.truncf %157 : vector<1x64x16xf32> to vector<1x64x16xbf16>
    "tpu.trace_start"() <{level = 10 : i32, message = "bne,bnd->bed"}> : () -> ()
    %cst_87 = arith.constant dense<0.000000e+00> : vector<1x16x32xf32>
    %159 = tpu.matmul %158, %137, %cst_87 {dimension_numbers = #tpu.dot_dimension_numbers<[1], [1], [2], [2], [0, 0, 0, 2, 1, 2], [0], [0]>} : vector<1x64x16xbf16>, vector<1x64x32xbf16>, vector<1x16x32xf32> -> vector<1x16x32xf32>
    "tpu.trace_stop"() : () -> ()
    %160 = vector.shape_cast %159 : vector<1x16x32xf32> to vector<16x32xf32>
    %161 = arith.truncf %160 : vector<16x32xf32> to vector<16x32xbf16>
    %c0_88 = arith.constant 0 : index
    %c0_89 = arith.constant 0 : index
    %162 = vector.load %arg8[%c0_88, %c0_89] : memref<32x32xbf16, #tpu.memory_space<vmem>>, vector<32x32xbf16>
    %cst_90 = arith.constant dense<0.000000e+00> : vector<16x32xf32>
    %163 = tpu.matmul %161, %162, %cst_90 {dimension_numbers = #tpu.dot_dimension_numbers<[1], [0], [0], [1], [0, 0, 1, 1], [], []>} : vector<16x32xbf16>, vector<32x32xbf16>, vector<16x32xf32> -> vector<16x32xf32>
    %c0_91 = arith.constant 0 : index
    %c0_92 = arith.constant 0 : index
    %164 = vector.load %arg9[%c0_91, %c0_92] : memref<1x32xf32, #tpu.memory_space<vmem>>, vector<1x32xf32>
    %165 = vector.broadcast %164 : vector<1x32xf32> to vector<16x32xf32>
    %166 = arith.addf %163, %165 : vector<16x32xf32>
    %cst_93 = arith.constant 5.000000e-01 : f32
    %167 = vector.broadcast %cst_93 : f32 to vector<16x32xf32>
    %168 = arith.mulf %167, %166 : vector<16x32xf32>
    %cst_94 = arith.constant 4.471500e-02 : f32
    %169 = vector.broadcast %cst_94 : f32 to vector<16x32xf32>
    %170 = arith.mulf %169, %166 : vector<16x32xf32>
    %171 = arith.mulf %170, %166 : vector<16x32xf32>
    %172 = arith.mulf %171, %166 : vector<16x32xf32>
    %173 = arith.addf %166, %172 : vector<16x32xf32>
    %cst_95 = arith.constant 0.797884583 : f32
    %174 = vector.broadcast %cst_95 : f32 to vector<16x32xf32>
    %175 = arith.mulf %174, %173 : vector<16x32xf32>
    %176 = math.tanh %175 : vector<16x32xf32>
    %cst_96 = arith.constant 1.000000e+00 : f32
    %177 = vector.broadcast %cst_96 : f32 to vector<16x32xf32>
    %178 = arith.addf %177, %176 : vector<16x32xf32>
    %179 = arith.mulf %168, %178 : vector<16x32xf32>
    %180 = vector.shape_cast %179 : vector<16x32xf32> to vector<1x16x32xf32>
    %181 = arith.truncf %180 : vector<1x16x32xf32> to vector<1x16x32xbf16>
    "tpu.trace_start"() <{level = 10 : i32, message = "bne,bed->bnd"}> : () -> ()
    %cst_97 = arith.constant dense<0.000000e+00> : vector<1x64x32xf32>
    %182 = tpu.matmul %158, %181, %cst_97 {dimension_numbers = #tpu.dot_dimension_numbers<[2], [1], [1], [2], [0, 0, 0, 1, 1, 2], [0], [0]>} : vector<1x64x16xbf16>, vector<1x16x32xbf16>, vector<1x64x32xf32> -> vector<1x64x32xf32>
    "tpu.trace_stop"() : () -> ()
    %183 = vector.extract_strided_slice %182 {offsets = [0, 0, 0], sizes = [1, 16, 32], strides = [1, 1, 1]} : vector<1x64x32xf32> to vector<1x16x32xf32>
    %184 = arith.truncf %183 : vector<1x16x32xf32> to vector<1x16x32xbf16>
    %c0_98 = arith.constant 0 : index
    %c0_99 = arith.constant 0 : index
    %c0_100 = arith.constant 0 : index
    %185 = vector.load %arg17[%c0_98, %c0_99, %c0_100] : memref<1x16x128xbf16, #tpu.memory_space<vmem>>, vector<1x16x32xbf16>
    tpu.vector_store %arg17[%c0_98, %c0_99, %c0_100], %184 {strides = array<i32>} : memref<1x16x128xbf16, #tpu.memory_space<vmem>>, vector<1x16x32xbf16>,
    %186 = vector.extract_strided_slice %182 {offsets = [0, 16, 0], sizes = [1, 16, 32], strides = [1, 1, 1]} : vector<1x64x32xf32> to vector<1x16x32xf32>
    %187 = arith.truncf %186 : vector<1x16x32xf32> to vector<1x16x32xbf16>
    %c0_101 = arith.constant 0 : index
    %c0_102 = arith.constant 0 : index
    %c32_103 = arith.constant 32 : index
    %188 = vector.load %arg17[%c0_101, %c0_102, %c32_103] : memref<1x16x128xbf16, #tpu.memory_space<vmem>>, vector<1x16x32xbf16>
    tpu.vector_store %arg17[%c0_101, %c0_102, %c32_103], %187 {strides = array<i32>} : memref<1x16x128xbf16, #tpu.memory_space<vmem>>, vector<1x16x32xbf16>,
    %189 = vector.extract_strided_slice %182 {offsets = [0, 32, 0], sizes = [1, 16, 32], strides = [1, 1, 1]} : vector<1x64x32xf32> to vector<1x16x32xf32>
    %190 = arith.truncf %189 : vector<1x16x32xf32> to vector<1x16x32xbf16>
    %c0_104 = arith.constant 0 : index
    %c0_105 = arith.constant 0 : index
    %c64 = arith.constant 64 : index
    %191 = vector.load %arg17[%c0_104, %c0_105, %c64] : memref<1x16x128xbf16, #tpu.memory_space<vmem>>, vector<1x16x32xbf16>
    tpu.vector_store %arg17[%c0_104, %c0_105, %c64], %190 {strides = array<i32>} : memref<1x16x128xbf16, #tpu.memory_space<vmem>>, vector<1x16x32xbf16>,
    %192 = vector.extract_strided_slice %182 {offsets = [0, 48, 0], sizes = [1, 16, 32], strides = [1, 1, 1]} : vector<1x64x32xf32> to vector<1x16x32xf32>
    %193 = arith.truncf %192 : vector<1x16x32xf32> to vector<1x16x32xbf16>
    %c0_106 = arith.constant 0 : index
    %c0_107 = arith.constant 0 : index
    %c96 = arith.constant 96 : index
    %194 = vector.load %arg17[%c0_106, %c0_107, %c96] : memref<1x16x128xbf16, #tpu.memory_space<vmem>>, vector<1x16x32xbf16>
    tpu.vector_store %arg17[%c0_106, %c0_107, %c96], %193 {strides = array<i32>} : memref<1x16x128xbf16, #tpu.memory_space<vmem>>, vector<1x16x32xbf16>,
    %c0_108 = arith.constant 0 : index
    %c0_109 = arith.constant 0 : index
    %c0_110 = arith.constant 0 : index
    %195 = vector.load %arg17[%c0_108, %c0_109, %c0_110] : memref<1x16x128xbf16, #tpu.memory_space<vmem>>, vector<1x16x128xbf16>
    %196 = vector.shape_cast %195 : vector<1x16x128xbf16> to vector<16x128xbf16>
    %c0_111 = arith.constant 0 : index
    %c0_112 = arith.constant 0 : index
    %197 = vector.load %arg10[%c0_111, %c0_112] : memref<128x128xbf16, #tpu.memory_space<vmem>>, vector<128x128xbf16>
    %cst_113 = arith.constant dense<0.000000e+00> : vector<16x128xf32>
    %198 = tpu.matmul %196, %197, %cst_113 {dimension_numbers = #tpu.dot_dimension_numbers<[1], [0], [0], [1], [0, 0, 1, 1], [], []>} : vector<16x128xbf16>, vector<128x128xbf16>, vector<16x128xf32> -> vector<16x128xf32>
    %c0_114 = arith.constant 0 : index
    %c0_115 = arith.constant 0 : index
    %199 = vector.load %arg11[%c0_114, %c0_115] : memref<1x128xf32, #tpu.memory_space<vmem>>, vector<1x128xf32>
    %200 = vector.broadcast %199 : vector<1x128xf32> to vector<16x128xf32>
    %201 = arith.addf %198, %200 : vector<16x128xf32>
    %cst_116 = arith.constant 5.000000e-01 : f32
    %202 = vector.broadcast %cst_116 : f32 to vector<16x128xf32>
    %203 = arith.mulf %202, %201 : vector<16x128xf32>
    %cst_117 = arith.constant 4.471500e-02 : f32
    %204 = vector.broadcast %cst_117 : f32 to vector<16x128xf32>
    %205 = arith.mulf %204, %201 : vector<16x128xf32>
    %206 = arith.mulf %205, %201 : vector<16x128xf32>
    %207 = arith.mulf %206, %201 : vector<16x128xf32>
    %208 = arith.addf %201, %207 : vector<16x128xf32>
    %cst_118 = arith.constant 0.797884583 : f32
    %209 = vector.broadcast %cst_118 : f32 to vector<16x128xf32>
    %210 = arith.mulf %209, %208 : vector<16x128xf32>
    %211 = math.tanh %210 : vector<16x128xf32>
    %cst_119 = arith.constant 1.000000e+00 : f32
    %212 = vector.broadcast %cst_119 : f32 to vector<16x128xf32>
    %213 = arith.addf %212, %211 : vector<16x128xf32>
    %214 = arith.mulf %203, %213 : vector<16x128xf32>
    %c0_120 = arith.constant 0 : index
    %c0_121 = arith.constant 0 : index
    %215 = memref.load %arg12[%c0_120, %c0_121] : memref<1x1xf32, #tpu.memory_space<smem>>
    %216 = vector.broadcast %215 : f32 to vector<16x128xf32>
    %217 = arith.mulf %216, %214 : vector<16x128xf32>
    %218 = arith.addf %1, %217 : vector<16x128xf32>
    %219 = vector.shape_cast %218 : vector<16x128xf32> to vector<1x16x128xf32>
    %c0_122 = arith.constant 0 : index
    %c0_123 = arith.constant 0 : index
    %c0_124 = arith.constant 0 : index
    %220 = vector.load %arg13[%c0_122, %c0_123, %c0_124] : memref<1x16x128xf32, #tpu.memory_space<vmem>>, vector<1x16x128xf32>
    tpu.vector_store %arg13[%c0_122, %c0_123, %c0_124], %219 {strides = array<i32>} : memref<1x16x128xf32, #tpu.memory_space<vmem>>, vector<1x16x128xf32>,
    return
  }
  func.func @transform_0(%arg0: i32) -> (i32, i32, i32) {
    %c0_i32 = arith.constant 0 : i32
    %c0_i32_0 = arith.constant 0 : i32
    %c0_i32_1 = arith.constant 0 : i32
    return %arg0, %c0_i32, %c0_i32_0 : i32, i32, i32
  }
  func.func @transform_1(%arg0: i32) -> (i32, i32) {
    %c0_i32 = arith.constant 0 : i32
    %c0_i32_0 = arith.constant 0 : i32
    %c0_i32_1 = arith.constant 0 : i32
    return %c0_i32, %c0_i32_0 : i32, i32
  }
  func.func @transform_2(%arg0: i32) -> (i32, i32) {
    %c0_i32 = arith.constant 0 : i32
    %c0_i32_0 = arith.constant 0 : i32
    %c0_i32_1 = arith.constant 0 : i32
    return %c0_i32, %c0_i32_0 : i32, i32
  }
  func.func @transform_3(%arg0: i32) -> (i32, i32) {
    %c0_i32 = arith.constant 0 : i32
    %c0_i32_0 = arith.constant 0 : i32
    %c0_i32_1 = arith.constant 0 : i32
    return %c0_i32, %c0_i32_0 : i32, i32
  }
  func.func @transform_4(%arg0: i32) -> (i32, i32) {
    %c0_i32 = arith.constant 0 : i32
    %c0_i32_0 = arith.constant 0 : i32
    %c0_i32_1 = arith.constant 0 : i32
    return %c0_i32, %c0_i32_0 : i32, i32
  }
  func.func @transform_5(%arg0: i32) -> (i32, i32) {
    %c0_i32 = arith.constant 0 : i32
    %c0_i32_0 = arith.constant 0 : i32
    %c0_i32_1 = arith.constant 0 : i32
    return %c0_i32, %c0_i32_0 : i32, i32
  }
  func.func @transform_6(%arg0: i32) -> (i32, i32) {
    %c0_i32 = arith.constant 0 : i32
    %c0_i32_0 = arith.constant 0 : i32
    %c0_i32_1 = arith.constant 0 : i32
    return %c0_i32, %c0_i32_0 : i32, i32
  }
  func.func @transform_7(%arg0: i32) -> (i32, i32) {
    %c0_i32 = arith.constant 0 : i32
    %c0_i32_0 = arith.constant 0 : i32
    %c0_i32_1 = arith.constant 0 : i32
    return %c0_i32, %c0_i32_0 : i32, i32
  }
  func.func @transform_8(%arg0: i32) -> (i32, i32) {
    %c0_i32 = arith.constant 0 : i32
    %c0_i32_0 = arith.constant 0 : i32
    %c0_i32_1 = arith.constant 0 : i32
    return %c0_i32, %c0_i32_0 : i32, i32
  }
  func.func @transform_9(%arg0: i32) -> (i32, i32) {
    %c0_i32 = arith.constant 0 : i32
    %c0_i32_0 = arith.constant 0 : i32
    %c0_i32_1 = arith.constant 0 : i32
    return %c0_i32, %c0_i32_0 : i32, i32
  }
  func.func @transform_10(%arg0: i32) -> (i32, i32) {
    %c0_i32 = arith.constant 0 : i32
    %c0_i32_0 = arith.constant 0 : i32
    %c0_i32_1 = arith.constant 0 : i32
    return %c0_i32, %c0_i32_0 : i32, i32
  }
  func.func @transform_11(%arg0: i32) -> (i32, i32) {
    %c0_i32 = arith.constant 0 : i32
    %c0_i32_0 = arith.constant 0 : i32
    %c0_i32_1 = arith.constant 0 : i32
    return %c0_i32, %c0_i32_0 : i32, i32
  }
  func.func @transform_12(%arg0: i32) -> (i32, i32, i32) {
    %c0_i32 = arith.constant 0 : i32
    %c0_i32_0 = arith.constant 0 : i32
    %c0_i32_1 = arith.constant 0 : i32
    return %arg0, %c0_i32, %c0_i32_0 : i32, i32, i32
  }
}

</mosaic_0001>

<llo_original>
// kernel: tpu_custom_call.1
$region0: #{tpu_custom_call.1}
  #allocation0 [shape = 'u32[]', space=smem, size = 0x4, offset = 0x4, fixed_abs, tag = 'smem constant byte address 0x4 - core index']
  #allocation1 [shape = 'u32[144,128]{1,0:T(1,128)}', space=vmem, size = 0x12000, scoped, tag = 'internal scratch']
  #allocation2 [shape = 'bf16[1,16,32]{2,1,0:T(8,128)(2,1)}', space=vmem, size = 0x1000, scoped, tag = 'scratch operand']
  #allocation3 [shape = 'bf16[1,64,32]{2,1,0:T(8,128)(2,1)}', space=vmem, size = 0x4000, scoped, tag = 'scratch operand']
  #allocation4 [shape = 'bf16[1,64,32]{2,1,0:T(8,128)(2,1)}', space=vmem, size = 0x4000, scoped, tag = 'scratch operand']
  #allocation5 [shape = 'bf16[1,16,128]{2,1,0:T(8,128)(2,1)}', space=vmem, size = 0x1000, scoped, tag = 'scratch operand']
  #allocation6 [shape = 'f32[1,1]{1,0:T(1,128)S(6)}', space=smem, size = 0x200, scoped, tag = 'scoped memory for tpu_custom_call.1']
  %s0 = inlined_call_operand.hbm [shape: f32[2,16,128], index: 0, kind: input, shape index: {}]
  %s1 = inlined_call_operand.vmem [shape: bf16[32,16], index: 1, kind: input, shape index: {}]
  %s2 = inlined_call_operand.hbm [shape: bf16[32,512], index: 2, kind: input, shape index: {}]
  %s3 = inlined_call_operand.hbm [shape: bf16[32,512], index: 3, kind: input, shape index: {}]
  %s4 = inlined_call_operand.vmem [shape: f32[1,512], index: 4, kind: input, shape index: {}]
  %s5 = inlined_call_operand.hbm [shape: bf16[128,128], index: 5, kind: input, shape index: {}]
  %s6 = inlined_call_operand.vmem [shape: f32[1,128], index: 6, kind: input, shape index: {}]
  %s7 = inlined_call_operand.vmem [shape: bf16[32,32], index: 7, kind: input, shape index: {}]
  %s8 = inlined_call_operand.vmem [shape: f32[1,32], index: 8, kind: input, shape index: {}]
  %s9 = inlined_call_operand.hbm [shape: bf16[128,128], index: 9, kind: input, shape index: {}]
  %s10 = inlined_call_operand.vmem [shape: f32[1,128], index: 10, kind: input, shape index: {}]
  %s11 = inlined_call_operand.<no memory space> [shape: f32[1,1], index: 11, kind: input, shape index: {}]
  %s12 = inlined_call_operand.hbm [shape: f32[2,16,128], index: 12, kind: output, shape index: {}]
  %s13 = sld [smem:[#allocation0]]
  $region101: #{tpu_custom_call.1} parent=0
    _
  %s15 = ssub.s32 1, %s13
  %s16 = scalar_select 0, %s15, %s13
  %17 = sst [smem:[#allocation6]] %s11
  $region1: #{tpu_custom_call.1} parent=0
    #allocation7 [shape = 'u8[16384]{0}', space=vmem, size = 0x4000, scoped, tag = 'input window, operand 0']
    #allocation8 [shape = 's32[2]{0}', space=sflag, size = 0x8, scoped, tag = 'scoped memory for tpu_custom_call.1']
    #allocation9 [shape = 's32[2]{0}', space=sflag, size = 0x8, scoped, tag = 'scoped memory for tpu_custom_call.1']
    #allocation10 [shape = 'u8[32768]{0}', space=vmem, size = 0x8000, scoped, tag = 'input window, operand 2, single buffered']
    #allocation11 [shape = 's32[1]{0}', space=sflag, size = 0x4, scoped, tag = 'scoped memory for tpu_custom_call.1']
    #allocation12 [shape = 'u8[32768]{0}', space=vmem, size = 0x8000, scoped, tag = 'input window, operand 3, single buffered']
    #allocation13 [shape = 'u8[32768]{0}', space=vmem, size = 0x8000, scoped, tag = 'input window, operand 5, single buffered']
    #allocation14 [shape = 's32[1]{0}', space=sflag, size = 0x4, scoped, tag = 'scoped memory for tpu_custom_call.1']
    #allocation15 [shape = 'u8[32768]{0}', space=vmem, size = 0x8000, scoped, tag = 'input window, operand 9, single buffered']
    #allocation16 [shape = 'u8[16384]{0}', space=vmem, size = 0x4000, scoped, tag = 'output window, operand 0']
    %18 = vsyncpa [#allocation8], 0
    %s19 = scalar_lea.sflag [#allocation8], 1
    %20 = vsyncpa %s19, 0
    %21 = vsyncpa [#allocation11], 0
    %22 = vsyncpa [#allocation14], 0
    %23 = vsyncpa [#allocation9], 0
    %s24 = scalar_lea.sflag [#allocation9], 1
    %25 = vsyncpa %s24, 0
    loop: start=0, step=1, limit=4
    $region2: #{tpu_custom_call.1} parent=1 // loop_pre_header
      _
    $region3: #{tpu_custom_call.1} parent=1 // loop_header
      %s27 = sphi 0, %s31
      %p28 = scmp.ge.s32.totalorder %s27, 4
      %s37 = sphi 0, %s39
      %s40 = sphi 0, %s37
      %s41 = sphi 0, %s40
      %s57 = sphi 0, %s41
      %s61 = sphi 0, %s61
      %s63 = sphi 0, %s61
      %s64 = sphi 0, %s63
      %s78 = sphi 0, %s64
      %s82 = sphi 0, %s82
      %s84 = sphi 0, %s82
      %s85 = sphi 0, %s84
      %s99 = sphi 0, %s85
      %s103 = sphi 0, %s103
      %s105 = sphi 0, %s103
      %s106 = sphi 0, %s105
      %s120 = sphi 0, %s106
      %s124 = sphi 0, %s124
      %s126 = sphi 0, %s124
      %s127 = sphi 0, %s126
      %s141 = sphi 0, %s127
      %s145 = sphi 0, %s145
      %s147 = sphi 0, %s145
      %s148 = sphi 0, %s147
      %s162 = sphi 0, %s148
      %s166 = sphi 0, %s166
      %s168 = sphi 0, %s166
      %s169 = sphi 0, %s168
      %s183 = sphi 0, %s169
      %s187 = sphi 0, %s187
      %s189 = sphi 0, %s187
      %s190 = sphi 0, %s189
      %s204 = sphi 0, %s190
      %s208 = sphi 0, %s208
      %s210 = sphi 0, %s208
      %s211 = sphi 0, %s210
      %s225 = sphi 0, %s211
      %s229 = sphi 0, %s229
      %s231 = sphi 0, %s229
      %s232 = sphi 0, %s231
      %s246 = sphi 0, %s232
      %s250 = sphi 0, %s250
      %s252 = sphi 0, %s250
      %s253 = sphi 0, %s252
      %s267 = sphi 0, %s253
      %s271 = sphi 0, %s271
      %s273 = sphi 0, %s271
      %s274 = sphi 0, %s273
      %s288 = sphi 0, %s274
      %s294 = sphi 0, %s296
      %s297 = sphi 0, %s294
      %s298 = sphi 0, %s297
      %s314 = sphi 0, %s298
    $region4: #{tpu_custom_call.1} parent=1 // loop_header_branch
      %30 = sbr.rel (%p28) target = $region8
    $region5: #{tpu_custom_call.1} parent=1 // loop_body
      %s32 = ssub.s32 %s27, 1
      %s33 = ssub.s32 %s27, 2
      %s34 = sadd.s32 %s27, 1
      %s35 = ssub.s32 %s27, %s34
      %p36 = scmp.eq.s32.totalorder %s35, 0
      %s38 = sadd.s32 %s37, 1
      %s39 = scalar_select %p36, %s37, %s38
      %p42 = pneg %p36
      %p43 = scmp.eq.s32.totalorder %s27, 1
      %p44 = por %p42, %p43
      %p45 = scmp.ne.s32.totalorder %s37, %s40
      %p46 = scmp.eq.s32.totalorder %s27, 0
      %p47 = por %p45, %p46
      %p48 = scmp.ne.s32.totalorder %s37, %s40
      %p49 = scmp.eq.s32.totalorder %s32, 1
      %p50 = por %p48, %p49
      %p51 = scmp.ne.s32.totalorder %s40, %s41
      %p52 = scmp.eq.s32.totalorder %s32, 0
      %p53 = por %p51, %p52
      %p54 = scmp.ne.s32.totalorder %s40, %s41
      %p55 = scmp.eq.s32.totalorder %s33, 1
      %p56 = por %p54, %p55
      %p58 = scmp.ne.s32.totalorder %s41, %s57
      %p59 = scmp.eq.s32.totalorder %s33, 0
      %p60 = por %p58, %p59
      %s62 = sadd.s32 %s61, 1
      %p65 = scmp.eq.s32.totalorder %s27, 1
      %p66 = scmp.ne.s32.totalorder %s61, %s63
      %p67 = scmp.eq.s32.totalorder %s27, 0
      %p68 = por %p66, %p67
      %p69 = scmp.ne.s32.totalorder %s61, %s63
      %p70 = scmp.eq.s32.totalorder %s32, 1
      %p71 = por %p69, %p70
      %p72 = scmp.ne.s32.totalorder %s63, %s64
      %p73 = scmp.eq.s32.totalorder %s32, 0
      %p74 = por %p72, %p73
      %p75 = scmp.ne.s32.totalorder %s63, %s64
      %p76 = scmp.eq.s32.totalorder %s33, 1
      %p77 = por %p75, %p76
      %p79 = scmp.ne.s32.totalorder %s64, %s78
      %p80 = scmp.eq.s32.totalorder %s33, 0
      %p81 = por %p79, %p80
      %s83 = sadd.s32 %s82, 1
      %p86 = scmp.eq.s32.totalorder %s27, 1
      %p87 = scmp.ne.s32.totalorder %s82, %s84
      %p88 = scmp.eq.s32.totalorder %s27, 0
      %p89 = por %p87, %p88
      %p90 = scmp.ne.s32.totalorder %s82, %s84
      %p91 = scmp.eq.s32.totalorder %s32, 1
      %p92 = por %p90, %p91
      %p93 = scmp.ne.s32.totalorder %s84, %s85
      %p94 = scmp.eq.s32.totalorder %s32, 0
      %p95 = por %p93, %p94
      %p96 = scmp.ne.s32.totalorder %s84, %s85
      %p97 = scmp.eq.s32.totalorder %s33, 1
      %p98 = por %p96, %p97
      %p100 = scmp.ne.s32.totalorder %s85, %s99
      %p101 = scmp.eq.s32.totalorder %s33, 0
      %p102 = por %p100, %p101
      %s104 = sadd.s32 %s103, 1
      %p107 = scmp.eq.s32.totalorder %s27, 1
      %p108 = scmp.ne.s32.totalorder %s103, %s105
      %p109 = scmp.eq.s32.totalorder %s27, 0
      %p110 = por %p108, %p109
      %p111 = scmp.ne.s32.totalorder %s103, %s105
      %p112 = scmp.eq.s32.totalorder %s32, 1
      %p113 = por %p111, %p112
      %p114 = scmp.ne.s32.totalorder %s105, %s106
      %p115 = scmp.eq.s32.totalorder %s32, 0
      %p116 = por %p114, %p115
      %p117 = scmp.ne.s32.totalorder %s105, %s106
      %p118 = scmp.eq.s32.totalorder %s33, 1
      %p119 = por %p117, %p118
      %p121 = scmp.ne.s32.totalorder %s106, %s120
      %p122 = scmp.eq.s32.totalorder %s33, 0
      %p123 = por %p121, %p122
      %s125 = sadd.s32 %s124, 1
      %p128 = scmp.eq.s32.totalorder %s27, 1
      %p129 = scmp.ne.s32.totalorder %s124, %s126
      %p130 = scmp.eq.s32.totalorder %s27, 0
      %p131 = por %p129, %p130
      %p132 = scmp.ne.s32.totalorder %s124, %s126
      %p133 = scmp.eq.s32.totalorder %s32, 1
      %p134 = por %p132, %p133
      %p135 = scmp.ne.s32.totalorder %s126, %s127
      %p136 = scmp.eq.s32.totalorder %s32, 0
      %p137 = por %p135, %p136
      %p138 = scmp.ne.s32.totalorder %s126, %s127
      %p139 = scmp.eq.s32.totalorder %s33, 1
      %p140 = por %p138, %p139
      %p142 = scmp.ne.s32.totalorder %s127, %s141
      %p143 = scmp.eq.s32.totalorder %s33, 0
      %p144 = por %p142, %p143
      %s146 = sadd.s32 %s145, 1
      %p149 = scmp.eq.s32.totalorder %s27, 1
      %p150 = scmp.ne.s32.totalorder %s145, %s147
      %p151 = scmp.eq.s32.totalorder %s27, 0
      %p152 = por %p150, %p151
      %p153 = scmp.ne.s32.totalorder %s145, %s147
      %p154 = scmp.eq.s32.totalorder %s32, 1
      %p155 = por %p153, %p154
      %p156 = scmp.ne.s32.totalorder %s147, %s148
      %p157 = scmp.eq.s32.totalorder %s32, 0
      %p158 = por %p156, %p157
      %p159 = scmp.ne.s32.totalorder %s147, %s148
      %p160 = scmp.eq.s32.totalorder %s33, 1
      %p161 = por %p159, %p160
      %p163 = scmp.ne.s32.totalorder %s148, %s162
      %p164 = scmp.eq.s32.totalorder %s33, 0
      %p165 = por %p163, %p164
      %s167 = sadd.s32 %s166, 1
      %p170 = scmp.eq.s32.totalorder %s27, 1
      %p171 = scmp.ne.s32.totalorder %s166, %s168
      %p172 = scmp.eq.s32.totalorder %s27, 0
      %p173 = por %p171, %p172
      %p174 = scmp.ne.s32.totalorder %s166, %s168
      %p175 = scmp.eq.s32.totalorder %s32, 1
      %p176 = por %p174, %p175
      %p177 = scmp.ne.s32.totalorder %s168, %s169
      %p178 = scmp.eq.s32.totalorder %s32, 0
      %p179 = por %p177, %p178
      %p180 = scmp.ne.s32.totalorder %s168, %s169
      %p181 = scmp.eq.s32.totalorder %s33, 1
      %p182 = por %p180, %p181
      %p184 = scmp.ne.s32.totalorder %s169, %s183
      %p185 = scmp.eq.s32.totalorder %s33, 0
      %p186 = por %p184, %p185
      %s188 = sadd.s32 %s187, 1
      %p191 = scmp.eq.s32.totalorder %s27, 1
      %p192 = scmp.ne.s32.totalorder %s187, %s189
      %p193 = scmp.eq.s32.totalorder %s27, 0
      %p194 = por %p192, %p193
      %p195 = scmp.ne.s32.totalorder %s187, %s189
      %p196 = scmp.eq.s32.totalorder %s32, 1
      %p197 = por %p195, %p196
      %p198 = scmp.ne.s32.totalorder %s189, %s190
      %p199 = scmp.eq.s32.totalorder %s32, 0
      %p200 = por %p198, %p199
      %p201 = scmp.ne.s32.totalorder %s189, %s190
      %p202 = scmp.eq.s32.totalorder %s33, 1
      %p203 = por %p201, %p202
      %p205 = scmp.ne.s32.totalorder %s190, %s204
      %p206 = scmp.eq.s32.totalorder %s33, 0
      %p207 = por %p205, %p206
      %s209 = sadd.s32 %s208, 1
      %p212 = scmp.eq.s32.totalorder %s27, 1
      %p213 = scmp.ne.s32.totalorder %s208, %s210
      %p214 = scmp.eq.s32.totalorder %s27, 0
      %p215 = por %p213, %p214
      %p216 = scmp.ne.s32.totalorder %s208, %s210
      %p217 = scmp.eq.s32.totalorder %s32, 1
      %p218 = por %p216, %p217
      %p219 = scmp.ne.s32.totalorder %s210, %s211
      %p220 = scmp.eq.s32.totalorder %s32, 0
      %p221 = por %p219, %p220
      %p222 = scmp.ne.s32.totalorder %s210, %s211
      %p223 = scmp.eq.s32.totalorder %s33, 1
      %p224 = por %p222, %p223
      %p226 = scmp.ne.s32.totalorder %s211, %s225
      %p227 = scmp.eq.s32.totalorder %s33, 0
      %p228 = por %p226, %p227
      %s230 = sadd.s32 %s229, 1
      %p233 = scmp.eq.s32.totalorder %s27, 1
      %p234 = scmp.ne.s32.totalorder %s229, %s231
      %p235 = scmp.eq.s32.totalorder %s27, 0
      %p236 = por %p234, %p235
      %p237 = scmp.ne.s32.totalorder %s229, %s231
      %p238 = scmp.eq.s32.totalorder %s32, 1
      %p239 = por %p237, %p238
      %p240 = scmp.ne.s32.totalorder %s231, %s232
      %p241 = scmp.eq.s32.totalorder %s32, 0
      %p242 = por %p240, %p241
      %p243 = scmp.ne.s32.totalorder %s231, %s232
      %p244 = scmp.eq.s32.totalorder %s33, 1
      %p245 = por %p243, %p244
      %p247 = scmp.ne.s32.totalorder %s232, %s246
      %p248 = scmp.eq.s32.totalorder %s33, 0
      %p249 = por %p247, %p248
      %s251 = sadd.s32 %s250, 1
      %p254 = scmp.eq.s32.totalorder %s27, 1
      %p255 = scmp.ne.s32.totalorder %s250, %s252
      %p256 = scmp.eq.s32.totalorder %s27, 0
      %p257 = por %p255, %p256
      %p258 = scmp.ne.s32.totalorder %s250, %s252
      %p259 = scmp.eq.s32.totalorder %s32, 1
      %p260 = por %p258, %p259
      %p261 = scmp.ne.s32.totalorder %s252, %s253
      %p262 = scmp.eq.s32.totalorder %s32, 0
      %p263 = por %p261, %p262
      %p264 = scmp.ne.s32.totalorder %s252, %s253
      %p265 = scmp.eq.s32.totalorder %s33, 1
      %p266 = por %p264, %p265
      %p268 = scmp.ne.s32.totalorder %s253, %s267
      %p269 = scmp.eq.s32.totalorder %s33, 0
      %p270 = por %p268, %p269
      %s272 = sadd.s32 %s271, 1
      %p275 = scmp.eq.s32.totalorder %s27, 1
      %p276 = scmp.ne.s32.totalorder %s271, %s273
      %p277 = scmp.eq.s32.totalorder %s27, 0
      %p278 = por %p276, %p277
      %p279 = scmp.ne.s32.totalorder %s271, %s273
      %p280 = scmp.eq.s32.totalorder %s32, 1
      %p281 = por %p279, %p280
      %p282 = scmp.ne.s32.totalorder %s273, %s274
      %p283 = scmp.eq.s32.totalorder %s32, 0
      %p284 = por %p282, %p283
      %p285 = scmp.ne.s32.totalorder %s273, %s274
      %p286 = scmp.eq.s32.totalorder %s33, 1
      %p287 = por %p285, %p286
      %p289 = scmp.ne.s32.totalorder %s274, %s288
      %p290 = scmp.eq.s32.totalorder %s33, 0
      %p291 = por %p289, %p290
      %s292 = ssub.s32 %s27, %s34
      %p293 = scmp.eq.s32.totalorder %s292, 0
      %s295 = sadd.s32 %s294, 1
      %s296 = scalar_select %p293, %s294, %s295
      %p299 = pneg %p293
      %p300 = scmp.eq.s32.totalorder %s27, 1
      %p301 = por %p299, %p300
      %p302 = scmp.ne.s32.totalorder %s294, %s297
      %p303 = scmp.eq.s32.totalorder %s27, 0
      %p304 = por %p302, %p303
      %p305 = scmp.ne.s32.totalorder %s294, %s297
      %p306 = scmp.eq.s32.totalorder %s32, 1
      %p307 = por %p305, %p306
      %p308 = scmp.ne.s32.totalorder %s297, %s298
      %p309 = scmp.eq.s32.totalorder %s32, 0
      %p310 = por %p308, %p309
      %p311 = scmp.ne.s32.totalorder %s297, %s298
      %p312 = scmp.eq.s32.totalorder %s33, 1
      %p313 = por %p311, %p312
      %p315 = scmp.ne.s32.totalorder %s298, %s314
      %p316 = scmp.eq.s32.totalorder %s33, 0
      %p317 = por %p315, %p316
      %p318 = scmp.le.s32.totalorder 1, %s27
      %p319 = scmp.lt.s32.totalorder %s27, 3
      %p320 = pnand %p318, %p319
      %p321 = pneg %p320
      // Predicated region
      $region9: #{tpu_custom_call.1} parent=5 // pred_check
        _
      $region10: #{tpu_custom_call.1} parent=5 // pred_check_branch
        %323 = sbr.rel (%p320) target = $region12
      $region11: #{tpu_custom_call.1} parent=5 // pred_region
        %s324 = ssub.s32 %s27, 1
        // Predicated region
        $region13: #{tpu_custom_call.1} parent=11 // pred_check
          %p325 = pneg %p74
        $region14: #{tpu_custom_call.1} parent=11 // pred_check_branch
          %327 = sbr.rel (%p325) target = $region16
        $region15: #{tpu_custom_call.1} parent=11 // pred_region
          _
        $region16: #{tpu_custom_call.1} parent=11 // pred_fallthru
          _
        // Predicated region
        $region17: #{tpu_custom_call.1} parent=11 // pred_check
          %p328 = pneg %p95
        $region18: #{tpu_custom_call.1} parent=11 // pred_check_branch
          %330 = sbr.rel (%p328) target = $region20
        $region19: #{tpu_custom_call.1} parent=11 // pred_region
          %s332 = ssub.s32 1024, 1024
          %333 = vsyncadd [#allocation11], %s332
          %s334 = sshll.u32 [#allocation10], 4
          %s335 = int_to_ptr.vmem [resolvable:$true] %s334
          %340 = dma.hbm_to_vmem [thread:$0]  %s2, 1024, %s335, [#allocation11], 256, 256, 16
        $region20: #{tpu_custom_call.1} parent=11 // pred_fallthru
          _
        // Predicated region
        $region21: #{tpu_custom_call.1} parent=11 // pred_check
          %p341 = pneg %p116
        $region22: #{tpu_custom_call.1} parent=11 // pred_check_branch
          %343 = sbr.rel (%p341) target = $region24
        $region23: #{tpu_custom_call.1} parent=11 // pred_region
          %s345 = ssub.s32 1024, 1024
          %346 = vsyncadd [#allocation11], %s345
          %s347 = sshll.u32 [#allocation12], 4
          %s348 = int_to_ptr.vmem [resolvable:$true] %s347
          %353 = dma.hbm_to_vmem [thread:$0]  %s3, 1024, %s348, [#allocation11], 256, 256, 16
        $region24: #{tpu_custom_call.1} parent=11 // pred_fallthru
          _
        // Predicated region
        $region25: #{tpu_custom_call.1} parent=11 // pred_check
          %p354 = pneg %p137
        $region26: #{tpu_custom_call.1} parent=11 // pred_check_branch
          %356 = sbr.rel (%p354) target = $region28
        $region27: #{tpu_custom_call.1} parent=11 // pred_region
          _
        $region28: #{tpu_custom_call.1} parent=11 // pred_fallthru
          _
        // Predicated region
        $region29: #{tpu_custom_call.1} parent=11 // pred_check
          %p357 = pneg %p158
        $region30: #{tpu_custom_call.1} parent=11 // pred_check_branch
          %359 = sbr.rel (%p357) target = $region32
        $region31: #{tpu_custom_call.1} parent=11 // pred_region
          %s361 = ssub.s32 1024, 1024
          %362 = vsyncadd [#allocation14], %s361
          %s363 = sshll.u32 [#allocation13], 4
          %s364 = int_to_ptr.vmem [resolvable:$true] %s363
          %369 = dma.hbm_to_vmem [thread:$0]  %s5, 1024, %s364, [#allocation14], 64, 64, 4
        $region32: #{tpu_custom_call.1} parent=11 // pred_fallthru
          _
        // Predicated region
        $region33: #{tpu_custom_call.1} parent=11 // pred_check
          %p370 = pneg %p179
        $region34: #{tpu_custom_call.1} parent=11 // pred_check_branch
          %372 = sbr.rel (%p370) target = $region36
        $region35: #{tpu_custom_call.1} parent=11 // pred_region
          _
        $region36: #{tpu_custom_call.1} parent=11 // pred_fallthru
          _
        // Predicated region
        $region37: #{tpu_custom_call.1} parent=11 // pred_check
          %p373 = pneg %p200
        $region38: #{tpu_custom_call.1} parent=11 // pred_check_branch
          %375 = sbr.rel (%p373) target = $region40
        $region39: #{tpu_custom_call.1} parent=11 // pred_region
          _
        $region40: #{tpu_custom_call.1} parent=11 // pred_fallthru
          _
        // Predicated region
        $region41: #{tpu_custom_call.1} parent=11 // pred_check
          %p376 = pneg %p221
        $region42: #{tpu_custom_call.1} parent=11 // pred_check_branch
          %378 = sbr.rel (%p376) target = $region44
        $region43: #{tpu_custom_call.1} parent=11 // pred_region
          _
        $region44: #{tpu_custom_call.1} parent=11 // pred_fallthru
          _
        // Predicated region
        $region45: #{tpu_custom_call.1} parent=11 // pred_check
          %p379 = pneg %p242
        $region46: #{tpu_custom_call.1} parent=11 // pred_check_branch
          %381 = sbr.rel (%p379) target = $region48
        $region47: #{tpu_custom_call.1} parent=11 // pred_region
          %s383 = ssub.s32 1024, 1024
          %384 = vsyncadd [#allocation14], %s383
          %s385 = sshll.u32 [#allocation15], 4
          %s386 = int_to_ptr.vmem [resolvable:$true] %s385
          %391 = dma.hbm_to_vmem [thread:$0]  %s9, 1024, %s386, [#allocation14], 64, 64, 4
        $region48: #{tpu_custom_call.1} parent=11 // pred_fallthru
          _
        // Predicated region
        $region49: #{tpu_custom_call.1} parent=11 // pred_check
          %p392 = pneg %p263
        $region50: #{tpu_custom_call.1} parent=11 // pred_check_branch
          %394 = sbr.rel (%p392) target = $region52
        $region51: #{tpu_custom_call.1} parent=11 // pred_region
          _
        $region52: #{tpu_custom_call.1} parent=11 // pred_fallthru
          _
        // Predicated region
        $region53: #{tpu_custom_call.1} parent=11 // pred_check
          %p395 = pneg %p284
        $region54: #{tpu_custom_call.1} parent=11 // pred_check_branch
          %397 = sbr.rel (%p395) target = $region56
        $region55: #{tpu_custom_call.1} parent=11 // pred_region
          _
        $region56: #{tpu_custom_call.1} parent=11 // pred_fallthru
          _
      $region12: #{tpu_custom_call.1} parent=5 // pred_fallthru
        _
      %p398 = scmp.lt.s32.totalorder %s27, 2
      // Predicated region
      $region57: #{tpu_custom_call.1} parent=5 // pred_check
        %p399 = pneg %p398
      $region58: #{tpu_custom_call.1} parent=5 // pred_check_branch
        %401 = sbr.rel (%p399) target = $region60
      $region59: #{tpu_custom_call.1} parent=5 // pred_region
        // Predicated region
        $region61: #{tpu_custom_call.1} parent=59 // pred_check
          %p402 = pneg %p47
        $region62: #{tpu_custom_call.1} parent=59 // pred_check_branch
          %404 = sbr.rel (%p402) target = $region64
        $region63: #{tpu_custom_call.1} parent=59 // pred_region
          %s405 = sand.u32 %s37, 1
          %s406 = scalar_lea.sflag [#allocation8], %s405
          %s407 = sand.u32 %s37, 1
          %s408 = smul.addr %s407, 16
          %s409 = scalar_lea.vmem [#allocation7], %s408
          %s411 = ssub.s32 256, 256
          %412 = vsyncadd %s406, %s411
          %s413 = smul.addr %s27, 2
          %s414 = smul.addr %s413, 128
          %s415 = scalar_lea.hbm %s0, %s414
          %s416 = sshll.u32 %s409, 4
          %s417 = int_to_ptr.vmem [resolvable:$true] %s416
          %422 = dma.hbm_to_vmem [thread:$0]  %s415, 256, %s417, %s406, 128, 128, 8
        $region64: #{tpu_custom_call.1} parent=59 // pred_fallthru
          _
      $region60: #{tpu_custom_call.1} parent=5 // pred_fallthru
        _
      %p423 = scmp.le.s32.totalorder 1, %s27
      %p424 = scmp.lt.s32.totalorder %s27, 3
      %p425 = pnand %p423, %p424
      %p426 = pneg %p425
      // Predicated region
      $region65: #{tpu_custom_call.1} parent=5 // pred_check
        _
      $region66: #{tpu_custom_call.1} parent=5 // pred_check_branch
        %428 = sbr.rel (%p425) target = $region68
      $region67: #{tpu_custom_call.1} parent=5 // pred_region
        %s429 = ssub.s32 %s27, 1
        %s430 = sand.u32 %s40, 1
        %s431 = scalar_lea.sflag [#allocation8], %s430
        %s432 = sand.u32 %s40, 1
        %s433 = smul.addr %s432, 16
        %s434 = scalar_lea.vmem [#allocation7], %s433
        // Predicated region
        $region69: #{tpu_custom_call.1} parent=67 // pred_check
          %p435 = pneg %p53
        $region70: #{tpu_custom_call.1} parent=67 // pred_check_branch
          %437 = sbr.rel (%p435) target = $region72
        $region71: #{tpu_custom_call.1} parent=67 // pred_region
          %438 = dma.done %s431, 256
        $region72: #{tpu_custom_call.1} parent=67 // pred_fallthru
          _
        // Predicated region
        $region73: #{tpu_custom_call.1} parent=67 // pred_check
          %p439 = pneg %p95
        $region74: #{tpu_custom_call.1} parent=67 // pred_check_branch
          %441 = sbr.rel (%p439) target = $region76
        $region75: #{tpu_custom_call.1} parent=67 // pred_region
          %442 = dma.done [#allocation11], 1024
        $region76: #{tpu_custom_call.1} parent=67 // pred_fallthru
          _
        // Predicated region
        $region77: #{tpu_custom_call.1} parent=67 // pred_check
          %p443 = pneg %p116
        $region78: #{tpu_custom_call.1} parent=67 // pred_check_branch
          %445 = sbr.rel (%p443) target = $region80
        $region79: #{tpu_custom_call.1} parent=67 // pred_region
          %446 = dma.done [#allocation11], 1024
        $region80: #{tpu_custom_call.1} parent=67 // pred_fallthru
          _
        // Predicated region
        $region81: #{tpu_custom_call.1} parent=67 // pred_check
          %p447 = pneg %p158
        $region82: #{tpu_custom_call.1} parent=67 // pred_check_branch
          %449 = sbr.rel (%p447) target = $region84
        $region83: #{tpu_custom_call.1} parent=67 // pred_region
          %450 = dma.done [#allocation14], 1024
        $region84: #{tpu_custom_call.1} parent=67 // pred_fallthru
          _
        // Predicated region
        $region85: #{tpu_custom_call.1} parent=67 // pred_check
          %p451 = pneg %p242
        $region86: #{tpu_custom_call.1} parent=67 // pred_check_branch
          %453 = sbr.rel (%p451) target = $region88
        $region87: #{tpu_custom_call.1} parent=67 // pred_region
          %454 = dma.done [#allocation14], 1024
        $region88: #{tpu_custom_call.1} parent=67 // pred_fallthru
          _
        %s455 = sand.u32 %s40, 1
        %s456 = scalar_lea.sflag [#allocation8], %s455
        %s457 = sand.u32 %s40, 1
        %s458 = smul.addr %s457, 16
        %s459 = scalar_lea.vmem [#allocation7], %s458
        %p460 = pneg %p53
        %p461 = pneg %p50
        %p462 = pneg %p74
        %p463 = pneg %p71
        %p464 = pneg %p95
        %p465 = pneg %p92
        %p466 = pneg %p116
        %p467 = pneg %p113
        %p468 = pneg %p137
        %p469 = pneg %p134
        %p470 = pneg %p158
        %p471 = pneg %p155
        %p472 = pneg %p179
        %p473 = pneg %p176
        %p474 = pneg %p200
        %p475 = pneg %p197
        %p476 = pneg %p221
        %p477 = pneg %p218
        %p478 = pneg %p242
        %p479 = pneg %p239
        %p480 = pneg %p263
        %p481 = pneg %p260
        %p482 = pneg %p284
        %p483 = pneg %p281
        %p484 = pneg %p310
        %p485 = pneg %p307
        %s486 = sand.u32 %s297, 1
        %s487 = scalar_lea.sflag [#allocation9], %s486
        %s488 = sand.u32 %s297, 1
        %s489 = smul.addr %s488, 16
        %s490 = scalar_lea.vmem [#allocation16], %s489
        %v492 = vld [vmem:[%s434] sm:$0xff]
        %v493 = vld [vmem:[%s434 + $0x8] sm:$0xff]
        %v494 = vpack.c.bf16 %v493, %v492
        %v495 = vadd.f32 %v492, %v493
        %v496 = vrot.slane %v495, 4
        %v497 = vadd.f32 %v495, %v496
        %v498 = vrot.slane %v497, 2
        %v499 = vadd.f32 %v497, %v498
        %v500 = vrot.slane %v499, 1
        %v501 = vadd.f32 %v499, %v500
        %v502 = vmax.f32 %v492, %v493
        %v503 = vrot.slane %v502, 4
        %v504 = vmax.f32 %v502, %v503
        %v505 = vrot.slane %v504, 2
        %v506 = vmax.f32 %v504, %v505
        %v507 = vrot.slane %v506, 1
        %v508 = vmax.f32 %v506, %v507
        %510 = vrot.lane.b32.xlu0 %v501, 96
        %v511 = vpop.permute.xlu0 %510
        %v513 = vadd.f32 %v501, %v511
        %515 = vrot.lane.b32.xlu0 %v508, 96
        %v516 = vpop.permute.xlu0 %515
        %v518 = vmax.f32 %v508, %v516
        %519 = vrot.lane.b32.xlu0 %v501, 64
        %v520 = vpop.permute.xlu0 %519
        %v522 = vadd.f32 %v513, %v520
        %523 = vrot.lane.b32.xlu0 %v508, 64
        %v524 = vpop.permute.xlu0 %523
        %v526 = vmax.f32 %v518, %v524
        %527 = vrot.lane.b32.xlu0 %v501, 32
        %v528 = vpop.permute.xlu0 %527
        %v530 = vadd.f32 %v522, %v528
        %531 = vrot.lane.b32.xlu0 %v508, 32
        %v532 = vpop.permute.xlu0 %531
        %v534 = vmax.f32 %v526, %v532
        %v535 = vmul.f32 %v530, 0.015625
        %v536 = vpack.c.bf16 %v535, %v535
        %v537 = vld [vmem:[#allocation10] sm:$0xff]
        %v538 = vld [vmem:[#allocation10 + $0x8] sm:$0xff]
        %v539 = vld [vmem:[#allocation10 + $0x10] sm:$0xff]
        %v540 = vld [vmem:[#allocation10 + $0x18] sm:$0xff]
        %v541 = vld [vmem:[#allocation10 + $0x20] sm:$0xff]
        %v542 = vld [vmem:[#allocation10 + $0x28] sm:$0xff]
        %v543 = vld [vmem:[#allocation10 + $0x30] sm:$0xff]
        %v544 = vld [vmem:[#allocation10 + $0x38] sm:$0xff]
        %v545 = vpack.c.bf16 %v534, %v534
        %v546 = vld [vmem:[#allocation12] sm:$0xff]
        %v547 = vld [vmem:[#allocation12 + $0x8] sm:$0xff]
        %v548 = vld [vmem:[#allocation12 + $0x10] sm:$0xff]
        %v549 = vld [vmem:[#allocation12 + $0x18] sm:$0xff]
        %v550 = vld [vmem:[#allocation12 + $0x20] sm:$0xff]
        %v551 = vld [vmem:[#allocation12 + $0x28] sm:$0xff]
        %v552 = vld [vmem:[#allocation12 + $0x30] sm:$0xff]
        %v553 = vld [vmem:[#allocation12 + $0x38] sm:$0xff]
        %v562 = vunpack.c.l.b16 %v546
        %v563 = vunpack.c.h.b16 %v546
        %v564 = vunpack.c.l.b16 %v547
        %v565 = vunpack.c.h.b16 %v547
        %v566 = vunpack.c.l.b16 %v548
        %v567 = vunpack.c.h.b16 %v548
        %v568 = vunpack.c.l.b16 %v549
        %v569 = vunpack.c.h.b16 %v549
        %v570 = vunpack.c.l.b16 %v550
        %v571 = vunpack.c.h.b16 %v550
        %v572 = vunpack.c.l.b16 %v551
        %v573 = vunpack.c.h.b16 %v551
        %v574 = vunpack.c.l.b16 %v552
        %v575 = vunpack.c.h.b16 %v552
        %v576 = vunpack.c.l.b16 %v553
        %v577 = vunpack.c.h.b16 %v553
        %v578 = vpack.c.b16 %v566, %v562
        %v579 = vpack.c.b16 %v567, %v563
        %v580 = vpack.c.b16 %v568, %v564
        %v581 = vpack.c.b16 %v569, %v565
        %v582 = vpack.c.b16 %v574, %v570
        %v583 = vpack.c.b16 %v575, %v571
        %v584 = vpack.c.b16 %v576, %v572
        %v585 = vpack.c.b16 %v577, %v573
        %vm594 = vcmask 261120
        %v596 = vsel %vm594, %v545, 0
        %598 = vmatprep.subr.bf16.mxu0 0
        %599 = vmatpush1.bf16.msra.mxu0 0
        %600 = vmatprep.subr.bf16.mxu0 0
        %601 = vmatpush1.bf16.msra.mxu0 0
        %602 = vmatprep.subr.bf16.mxu0 0
        %603 = vmatpush1.bf16.msra.mxu0 0
        %604 = vmatprep.subr.bf16.mxu0 0
        %605 = vmatpush1.bf16.msra.mxu0 0
        %606 = vmatprep.subr.bf16.mxu0 0
        %607 = vmatpush1.bf16.msra.mxu0 0
        %608 = vmatprep.subr.bf16.mxu0 0
        %609 = vmatpush1.bf16.msra.mxu0 0
        %610 = vmatprep.subr.bf16.mxu0 %v583
        %611 = vmatpush1.bf16.msra.mxu0 %v582
        %612 = vmatprep.subr.bf16.mxu0 %v579
        %613 = vmatpush1.bf16.msra.mxu0 %v578
        %614 = vmatprep.subr.bf16.mxu0 0
        %615 = vmatpush2.bf16.msra.mxu0 0
        %616 = vmatprep.subr.bf16.mxu0 0
        %617 = vmatpush2.bf16.msra.mxu0 0
        %618 = vmatprep.subr.bf16.mxu0 0
        %619 = vmatpush2.bf16.msra.mxu0 0
        %620 = vmatprep.subr.bf16.mxu0 0
        %621 = vmatpush2.bf16.msra.mxu0 0
        %622 = vmatprep.subr.bf16.mxu0 0
        %623 = vmatpush2.bf16.msra.mxu0 0
        %624 = vmatprep.subr.bf16.mxu0 0
        %625 = vmatpush2.bf16.msra.mxu0 0
        %626 = vmatprep.subr.bf16.mxu0 0
        %627 = vmatpush2.bf16.msra.mxu0 0
        %628 = vmatprep.subr.bf16.mxu0 0
        %629 = vmatpush2.bf16.msra.mxu0 0
        %630 = vmatprep.mubr.bf16.mxu0 0
        %631 = vmatmul.mubr.bf16.gmra.mxu0 %v596
        %v632 = vpop.f32.mrf.mxu0
        %v633 = vadd.f32 0.0, %v632
        %v634 = vpop.f32.mrf.mxu0
        %v635 = vadd.f32 0.0, %v634
        %v636 = vpop.f32.mrf.mxu0
        %v637 = vpop.f32.mrf.mxu0
        %638 = vdwg.mxu0
        %639 = vmatprep.subr.bf16.mxu0 0
        %640 = vmatpush1.bf16.msra.mxu0 0
        %641 = vmatprep.subr.bf16.mxu0 0
        %642 = vmatpush1.bf16.msra.mxu0 0
        %643 = vmatprep.subr.bf16.mxu0 0
        %644 = vmatpush1.bf16.msra.mxu0 0
        %645 = vmatprep.subr.bf16.mxu0 0
        %646 = vmatpush1.bf16.msra.mxu0 0
        %647 = vmatprep.subr.bf16.mxu0 0
        %648 = vmatpush1.bf16.msra.mxu0 0
        %649 = vmatprep.subr.bf16.mxu0 0
        %650 = vmatpush1.bf16.msra.mxu0 0
        %651 = vmatprep.subr.bf16.mxu0 %v585
        %652 = vmatpush1.bf16.msra.mxu0 %v584
        %653 = vmatprep.subr.bf16.mxu0 %v581
        %654 = vmatpush1.bf16.msra.mxu0 %v580
        %655 = vmatprep.subr.bf16.mxu0 0
        %656 = vmatpush2.bf16.msra.mxu0 0
        %657 = vmatprep.subr.bf16.mxu0 0
        %658 = vmatpush2.bf16.msra.mxu0 0
        %659 = vmatprep.subr.bf16.mxu0 0
        %660 = vmatpush2.bf16.msra.mxu0 0
        %661 = vmatprep.subr.bf16.mxu0 0
        %662 = vmatpush2.bf16.msra.mxu0 0
        %663 = vmatprep.subr.bf16.mxu0 0
        %664 = vmatpush2.bf16.msra.mxu0 0
        %665 = vmatprep.subr.bf16.mxu0 0
        %666 = vmatpush2.bf16.msra.mxu0 0
        %667 = vmatprep.subr.bf16.mxu0 0
        %668 = vmatpush2.bf16.msra.mxu0 0
        %669 = vmatprep.subr.bf16.mxu0 0
        %670 = vmatpush2.bf16.msra.mxu0 0
        %671 = vmatprep.mubr.bf16.mxu0 0
        %672 = vmatmul.mubr.bf16.gmra.mxu0 %v596
        %v673 = vpop.f32.mrf.mxu0
        %v674 = vadd.f32 0.0, %v673
        %v675 = vpop.f32.mrf.mxu0
        %v676 = vadd.f32 0.0, %v675
        %v677 = vpop.f32.mrf.mxu0
        %v678 = vpop.f32.mrf.mxu0
        %679 = vdwg.mxu0
        %v688 = vunpack.c.l.b16 %v537
        %v689 = vunpack.c.h.b16 %v537
        %v690 = vunpack.c.l.b16 %v538
        %v691 = vunpack.c.h.b16 %v538
        %v692 = vunpack.c.l.b16 %v539
        %v693 = vunpack.c.h.b16 %v539
        %v694 = vunpack.c.l.b16 %v540
        %v695 = vunpack.c.h.b16 %v540
        %v696 = vunpack.c.l.b16 %v541
        %v697 = vunpack.c.h.b16 %v541
        %v698 = vunpack.c.l.b16 %v542
        %v699 = vunpack.c.h.b16 %v542
        %v700 = vunpack.c.l.b16 %v543
        %v701 = vunpack.c.h.b16 %v543
        %v702 = vunpack.c.l.b16 %v544
        %v703 = vunpack.c.h.b16 %v544
        %v704 = vpack.c.b16 %v692, %v688
        %v705 = vpack.c.b16 %v693, %v689
        %v706 = vpack.c.b16 %v694, %v690
        %v707 = vpack.c.b16 %v695, %v691
        %v708 = vpack.c.b16 %v700, %v696
        %v709 = vpack.c.b16 %v701, %v697
        %v710 = vpack.c.b16 %v702, %v698
        %v711 = vpack.c.b16 %v703, %v699
        %v721 = vsel %vm594, %v536, 0
        %723 = vmatprep.subr.bf16.mxu0 0
        %724 = vmatpush1.bf16.msra.mxu0 0
        %725 = vmatprep.subr.bf16.mxu0 0
        %726 = vmatpush1.bf16.msra.mxu0 0
        %727 = vmatprep.subr.bf16.mxu0 0
        %728 = vmatpush1.bf16.msra.mxu0 0
        %729 = vmatprep.subr.bf16.mxu0 0
        %730 = vmatpush1.bf16.msra.mxu0 0
        %731 = vmatprep.subr.bf16.mxu0 0
        %732 = vmatpush1.bf16.msra.mxu0 0
        %733 = vmatprep.subr.bf16.mxu0 0
        %734 = vmatpush1.bf16.msra.mxu0 0
        %735 = vmatprep.subr.bf16.mxu0 %v709
        %736 = vmatpush1.bf16.msra.mxu0 %v708
        %737 = vmatprep.subr.bf16.mxu0 %v705
        %738 = vmatpush1.bf16.msra.mxu0 %v704
        %739 = vmatprep.subr.bf16.mxu0 0
        %740 = vmatpush2.bf16.msra.mxu0 0
        %741 = vmatprep.subr.bf16.mxu0 0
        %742 = vmatpush2.bf16.msra.mxu0 0
        %743 = vmatprep.subr.bf16.mxu0 0
        %744 = vmatpush2.bf16.msra.mxu0 0
        %745 = vmatprep.subr.bf16.mxu0 0
        %746 = vmatpush2.bf16.msra.mxu0 0
        %747 = vmatprep.subr.bf16.mxu0 0
        %748 = vmatpush2.bf16.msra.mxu0 0
        %749 = vmatprep.subr.bf16.mxu0 0
        %750 = vmatpush2.bf16.msra.mxu0 0
        %751 = vmatprep.subr.bf16.mxu0 0
        %752 = vmatpush2.bf16.msra.mxu0 0
        %753 = vmatprep.subr.bf16.mxu0 0
        %754 = vmatpush2.bf16.msra.mxu0 0
        %755 = vmatprep.mubr.bf16.mxu0 0
        %756 = vmatmul.mubr.bf16.gmra.mxu0 %v721
        %v757 = vpop.f32.mrf.mxu0
        %v758 = vadd.f32 %v633, %v757
        %v759 = vpop.f32.mrf.mxu0
        %v760 = vadd.f32 %v635, %v759
        %v761 = vpop.f32.mrf.mxu0
        %v762 = vpop.f32.mrf.mxu0
        %763 = vdwg.mxu0
        %764 = vmatprep.subr.bf16.mxu0 0
        %765 = vmatpush1.bf16.msra.mxu0 0
        %766 = vmatprep.subr.bf16.mxu0 0
        %767 = vmatpush1.bf16.msra.mxu0 0
        %768 = vmatprep.subr.bf16.mxu0 0
        %769 = vmatpush1.bf16.msra.mxu0 0
        %770 = vmatprep.subr.bf16.mxu0 0
        %771 = vmatpush1.bf16.msra.mxu0 0
        %772 = vmatprep.subr.bf16.mxu0 0
        %773 = vmatpush1.bf16.msra.mxu0 0
        %774 = vmatprep.subr.bf16.mxu0 0
        %775 = vmatpush1.bf16.msra.mxu0 0
        %776 = vmatprep.subr.bf16.mxu0 %v711
        %777 = vmatpush1.bf16.msra.mxu0 %v710
        %778 = vmatprep.subr.bf16.mxu0 %v707
        %779 = vmatpush1.bf16.msra.mxu0 %v706
        %780 = vmatprep.subr.bf16.mxu0 0
        %781 = vmatpush2.bf16.msra.mxu0 0
        %782 = vmatprep.subr.bf16.mxu0 0
        %783 = vmatpush2.bf16.msra.mxu0 0
        %784 = vmatprep.subr.bf16.mxu0 0
        %785 = vmatpush2.bf16.msra.mxu0 0
        %786 = vmatprep.subr.bf16.mxu0 0
        %787 = vmatpush2.bf16.msra.mxu0 0
        %788 = vmatprep.subr.bf16.mxu0 0
        %789 = vmatpush2.bf16.msra.mxu0 0
        %790 = vmatprep.subr.bf16.mxu0 0
        %791 = vmatpush2.bf16.msra.mxu0 0
        %792 = vmatprep.subr.bf16.mxu0 0
        %793 = vmatpush2.bf16.msra.mxu0 0
        %794 = vmatprep.subr.bf16.mxu0 0
        %795 = vmatpush2.bf16.msra.mxu0 0
        %796 = vmatprep.mubr.bf16.mxu0 0
        %797 = vmatmul.mubr.bf16.gmra.mxu0 %v721
        %v798 = vpop.f32.mrf.mxu0
        %v799 = vadd.f32 %v674, %v798
        %v800 = vpop.f32.mrf.mxu0
        %v801 = vadd.f32 %v676, %v800
        %v802 = vpop.f32.mrf.mxu0
        %v803 = vpop.f32.mrf.mxu0
        %804 = vdwg.mxu0
        %v805 = vld [vmem:[%s4] sm:$0xf]
        %v807 = vlaneseq
        %v808 = vshrl.u32 %v807, 7
        %v809 = vsub.s32 0, %v808
        %v810 = vrot.slane %v805, %v809
        %v811 = vlaneseq
        %v812 = vshrl.u32 %v811, 7
        %v813 = vsub.s32 1, %v812
        %v814 = vrot.slane %v805, %v813
        %v815 = vlaneseq
        %v816 = vshrl.u32 %v815, 7
        %v817 = vsub.s32 2, %v816
        %v818 = vrot.slane %v805, %v817
        %v819 = vlaneseq
        %v820 = vshrl.u32 %v819, 7
        %v821 = vsub.s32 3, %v820
        %v822 = vrot.slane %v805, %v821
        %v827 = vadd.f32 %v758, %v810
        %v828 = vadd.f32 %v760, %v814
        %v829 = vadd.f32 %v799, %v818
        %v830 = vadd.f32 %v801, %v822
        %v831 = vpack.c.bf16 %v827, %v827
        %vm832 = vcmask 253952
        %vm833 = vsmask.f32 256
        %vm834 = vmand %vm832, %vm833
        %v835 = vld [vmem:[#allocation2] sm:$0x1]
        %v836 = vsel %vm834, %v831, %v835
        %837 = vst [vmem:[#allocation2] sm:$0x1] %v836
        %v839 = vunpack.c.l.b16 %v831
        %v840 = vpack.c.b16 %v839, %v839
        %v842 = vshll.u32 %v840, 16
        %844 = vrot.lane.b32.xlu0 %v842, 96
        %v845 = vpop.permute.xlu0 %844
        %vm847 = vsmask.f32 7938
        %vm848 = vmand %vm832, %vm847
        %v849 = vld [vmem:[#allocation2] sm:$0x1]
        %v850 = vsel %vm848, %v845, %v849
        %851 = vst [vmem:[#allocation2] sm:$0x1] %v850
        %v852 = vrot.slane %v840, 7
        %853 = vrot.lane.b32.xlu0 %v852, 64
        %v854 = vpop.permute.xlu0 %853
        %vm856 = vcmask 254977
        %vm857 = vsmask.f32 1280
        %vm858 = vmand %vm856, %vm857
        %v859 = vld [vmem:[#allocation2] sm:$0x2]
        %v860 = vsel %vm858, %v854, %v859
        %861 = vst [vmem:[#allocation2] sm:$0x2] %v860
        %v862 = vrot.slane %v842, 7
        %863 = vrot.lane.b32.xlu0 %v862, 32
        %v864 = vpop.permute.xlu0 %863
        %vm866 = vsmask.f32 7942
        %vm867 = vmand %vm856, %vm866
        %v868 = vld [vmem:[#allocation2] sm:$0x2]
        %v869 = vsel %vm867, %v864, %v868
        %870 = vst [vmem:[#allocation2] sm:$0x2] %v869
        %v871 = vpack.c.bf16 %v828, %v828
        %v873 = vunpack.c.l.b16 %v871
        %v874 = vpack.c.b16 %v873, %v873
        %v875 = vrot.slane %v874, 6
        %vm877 = vcmask 256002
        %vm878 = vsmask.f32 2304
        %vm879 = vmand %vm877, %vm878
        %v880 = vld [vmem:[#allocation2] sm:$0x4]
        %v881 = vsel %vm879, %v875, %v880
        %882 = vst [vmem:[#allocation2] sm:$0x4] %v881
        %v884 = vshll.u32 %v874, 16
        %v886 = vrot.slane %v884, 6
        %887 = vrot.lane.b32.xlu0 %v886, 96
        %v888 = vpop.permute.xlu0 %887
        %vm890 = vsmask.f32 7946
        %vm891 = vmand %vm877, %vm890
        %v892 = vld [vmem:[#allocation2] sm:$0x4]
        %v893 = vsel %vm891, %v888, %v892
        %894 = vst [vmem:[#allocation2] sm:$0x4] %v893
        %v895 = vrot.slane %v874, 5
        %896 = vrot.lane.b32.xlu0 %v895, 64
        %v897 = vpop.permute.xlu0 %896
        %vm899 = vcmask 257027
        %vm900 = vsmask.f32 3328
        %vm901 = vmand %vm899, %vm900
        %v902 = vld [vmem:[#allocation2] sm:$0x8]
        %v903 = vsel %vm901, %v897, %v902
        %904 = vst [vmem:[#allocation2] sm:$0x8] %v903
        %v905 = vrot.slane %v884, 5
        %906 = vrot.lane.b32.xlu0 %v905, 32
        %v907 = vpop.permute.xlu0 %906
        %vm909 = vsmask.f32 7950
        %vm910 = vmand %vm899, %vm909
        %v911 = vld [vmem:[#allocation2] sm:$0x8]
        %v912 = vsel %vm910, %v907, %v911
        %913 = vst [vmem:[#allocation2] sm:$0x8] %v912
        %v914 = vpack.c.bf16 %v829, %v829
        %v915 = vld [vmem:[#allocation2 + $0x4] sm:$0x1]
        %v916 = vsel %vm834, %v914, %v915
        %917 = vst [vmem:[#allocation2 + $0x4] sm:$0x1] %v916
        %v919 = vunpack.c.l.b16 %v914
        %v920 = vpack.c.b16 %v919, %v919
        %v922 = vshll.u32 %v920, 16
        %924 = vrot.lane.b32.xlu0 %v922, 96
        %v925 = vpop.permute.xlu0 %924
        %v927 = vld [vmem:[#allocation2 + $0x4] sm:$0x1]
        %v928 = vsel %vm848, %v925, %v927
        %929 = vst [vmem:[#allocation2 + $0x4] sm:$0x1] %v928
        %v930 = vrot.slane %v920, 7
        %931 = vrot.lane.b32.xlu0 %v930, 64
        %v932 = vpop.permute.xlu0 %931
        %v934 = vld [vmem:[#allocation2 + $0x4] sm:$0x2]
        %v935 = vsel %vm858, %v932, %v934
        %936 = vst [vmem:[#allocation2 + $0x4] sm:$0x2] %v935
        %v937 = vrot.slane %v922, 7
        %938 = vrot.lane.b32.xlu0 %v937, 32
        %v939 = vpop.permute.xlu0 %938
        %v941 = vld [vmem:[#allocation2 + $0x4] sm:$0x2]
        %v942 = vsel %vm867, %v939, %v941
        %943 = vst [vmem:[#allocation2 + $0x4] sm:$0x2] %v942
        %v944 = vpack.c.bf16 %v830, %v830
        %v946 = vunpack.c.l.b16 %v944
        %v947 = vpack.c.b16 %v946, %v946
        %v948 = vrot.slane %v947, 6
        %v950 = vld [vmem:[#allocation2 + $0x4] sm:$0x4]
        %v951 = vsel %vm879, %v948, %v950
        %952 = vst [vmem:[#allocation2 + $0x4] sm:$0x4] %v951
        %v954 = vshll.u32 %v947, 16
        %v956 = vrot.slane %v954, 6
        %957 = vrot.lane.b32.xlu0 %v956, 96
        %v958 = vpop.permute.xlu0 %957
        %v960 = vld [vmem:[#allocation2 + $0x4] sm:$0x4]
        %v961 = vsel %vm891, %v958, %v960
        %962 = vst [vmem:[#allocation2 + $0x4] sm:$0x4] %v961
        %v963 = vrot.slane %v947, 5
        %964 = vrot.lane.b32.xlu0 %v963, 64
        %v965 = vpop.permute.xlu0 %964
        %v967 = vld [vmem:[#allocation2 + $0x4] sm:$0x8]
        %v968 = vsel %vm901, %v965, %v967
        %969 = vst [vmem:[#allocation2 + $0x4] sm:$0x8] %v968
        %v970 = vrot.slane %v954, 5
        %971 = vrot.lane.b32.xlu0 %v970, 32
        %v972 = vpop.permute.xlu0 %971
        %v974 = vld [vmem:[#allocation2 + $0x4] sm:$0x8]
        %v975 = vsel %vm910, %v972, %v974
        %976 = vst [vmem:[#allocation2 + $0x4] sm:$0x8] %v975
        %v977 = vld [vmem:[#allocation13] sm:$0xf]
        %v978 = vld [vmem:[#allocation13 + $0x4] sm:$0xf]
        %v979 = vld [vmem:[#allocation13 + $0x8] sm:$0xf]
        %v980 = vld [vmem:[#allocation13 + $0xc] sm:$0xf]
        %v981 = vld [vmem:[#allocation13 + $0x10] sm:$0xf]
        %v982 = vld [vmem:[#allocation13 + $0x14] sm:$0xf]
        %v983 = vld [vmem:[#allocation13 + $0x18] sm:$0xf]
        %v984 = vld [vmem:[#allocation13 + $0x1c] sm:$0xf]
        %v985 = vld [vmem:[#allocation13 + $0x20] sm:$0xf]
        %v986 = vld [vmem:[#allocation13 + $0x24] sm:$0xf]
        %v987 = vld [vmem:[#allocation13 + $0x28] sm:$0xf]
        %v988 = vld [vmem:[#allocation13 + $0x2c] sm:$0xf]
        %v989 = vld [vmem:[#allocation13 + $0x30] sm:$0xf]
        %v990 = vld [vmem:[#allocation13 + $0x34] sm:$0xf]
        %v991 = vld [vmem:[#allocation13 + $0x38] sm:$0xf]
        %v992 = vld [vmem:[#allocation13 + $0x3c] sm:$0xf]
        %v993 = vld [vmem:[%s6] sm:$0x1]
        %v995 = vlaneseq
        %v996 = vshrl.u32 %v995, 7
        %v997 = vsub.s32 0, %v996
        %v998 = vrot.slane %v993, %v997
        %v1016 = vunpack.c.l.b16 %v977
        %v1017 = vunpack.c.l.b16 %v978
        %v1018 = vunpack.c.l.b16 %v979
        %v1019 = vunpack.c.l.b16 %v980
        %v1020 = vunpack.c.l.b16 %v981
        %v1021 = vunpack.c.l.b16 %v982
        %v1022 = vunpack.c.l.b16 %v983
        %v1023 = vunpack.c.l.b16 %v984
        %v1024 = vunpack.c.l.b16 %v985
        %v1025 = vunpack.c.l.b16 %v986
        %v1026 = vunpack.c.l.b16 %v987
        %v1027 = vunpack.c.l.b16 %v988
        %v1028 = vunpack.c.l.b16 %v989
        %v1029 = vunpack.c.l.b16 %v990
        %v1030 = vunpack.c.l.b16 %v991
        %v1031 = vunpack.c.l.b16 %v992
        %v1032 = vpack.c.b16 %v1017, %v1016
        %v1033 = vpack.c.b16 %v1019, %v1018
        %v1034 = vpack.c.b16 %v1021, %v1020
        %v1035 = vpack.c.b16 %v1023, %v1022
        %v1036 = vpack.c.b16 %v1025, %v1024
        %v1037 = vpack.c.b16 %v1027, %v1026
        %v1038 = vpack.c.b16 %v1029, %v1028
        %v1039 = vpack.c.b16 %v1031, %v1030
        %1048 = vmatprep.subr.bf16.mxu0 0
        %1049 = vmatpush1.bf16.msra.mxu0 %v1039
        %1050 = vmatprep.subr.bf16.mxu0 0
        %1051 = vmatpush1.bf16.msra.mxu0 %v1038
        %1052 = vmatprep.subr.bf16.mxu0 0
        %1053 = vmatpush1.bf16.msra.mxu0 %v1037
        %1054 = vmatprep.subr.bf16.mxu0 0
        %1055 = vmatpush1.bf16.msra.mxu0 %v1036
        %1056 = vmatprep.subr.bf16.mxu0 0
        %1057 = vmatpush1.bf16.msra.mxu0 %v1035
        %1058 = vmatprep.subr.bf16.mxu0 0
        %1059 = vmatpush1.bf16.msra.mxu0 %v1034
        %1060 = vmatprep.subr.bf16.mxu0 0
        %1061 = vmatpush1.bf16.msra.mxu0 %v1033
        %1062 = vmatprep.subr.bf16.mxu0 0
        %1063 = vmatpush1.bf16.msra.mxu0 %v1032
        %1064 = vmatprep.subr.bf16.mxu0 0
        %1065 = vmatpush2.bf16.msra.mxu0 0
        %1066 = vmatprep.subr.bf16.mxu0 0
        %1067 = vmatpush2.bf16.msra.mxu0 0
        %1068 = vmatprep.subr.bf16.mxu0 0
        %1069 = vmatpush2.bf16.msra.mxu0 0
        %1070 = vmatprep.subr.bf16.mxu0 0
        %1071 = vmatpush2.bf16.msra.mxu0 0
        %1072 = vmatprep.subr.bf16.mxu0 0
        %1073 = vmatpush2.bf16.msra.mxu0 0
        %1074 = vmatprep.subr.bf16.mxu0 0
        %1075 = vmatpush2.bf16.msra.mxu0 0
        %1076 = vmatprep.subr.bf16.mxu0 0
        %1077 = vmatpush2.bf16.msra.mxu0 0
        %1078 = vmatprep.subr.bf16.mxu0 0
        %1079 = vmatpush2.bf16.msra.mxu0 0
        %1080 = vmatprep.mubr.bf16.mxu0 0
        %1081 = vmatmul.mubr.bf16.gmra.mxu0 %v494
        %v1082 = vpop.f32.mrf.mxu0
        %v1083 = vadd.f32 %v998, %v1082
        %v1084 = vpop.f32.mrf.mxu0
        %v1085 = vpop.f32.mrf.mxu0
        %v1086 = vadd.f32 %v998, %v1085
        %v1087 = vpop.f32.mrf.mxu0
        %1088 = vdwg.mxu0
        %v1089 = vpack.c.bf16 %v1086, %v1083
        %v1091 = vunpack.c.l.b16 %v494
        %v1092 = vunpack.c.h.b16 %v494
        %v1093 = vpack.c.b16 %v1091, %v1091
        %v1094 = vpack.c.b16 %v1092, %v1092
        %vm1097 = vcmask 257024
        %1098 = vst.msk [vmem:[#allocation3] sm:$0xf] %vm1097, %v1093
        %1099 = vst.msk [vmem:[#allocation3 + $0x4] sm:$0xf] %vm1097, %v1094
        %v1101 = vunpack.c.l.b16 %v1089
        %v1102 = vunpack.c.h.b16 %v1089
        %v1103 = vpack.c.b16 %v1101, %v1101
        %v1104 = vpack.c.b16 %v1102, %v1102
        %1107 = vst.msk [vmem:[#allocation4] sm:$0xf] %vm1097, %v1103
        %1108 = vst.msk [vmem:[#allocation4 + $0x4] sm:$0xf] %vm1097, %v1104
        %1109 = vrot.lane.b32.xlu0 %v1093, 96
        %v1110 = vpop.permute.xlu0 %1109
        %1111 = vrot.lane.b32.xlu0 %v1094, 96
        %v1112 = vpop.permute.xlu0 %1111
        %1115 = vst.msk [vmem:[#allocation3 + $0x8] sm:$0xf] %vm1097, %v1110
        %1116 = vst.msk [vmem:[#allocation3 + $0xc] sm:$0xf] %vm1097, %v1112
        %1117 = vrot.lane.b32.xlu0 %v1103, 96
        %v1118 = vpop.permute.xlu0 %1117
        %1119 = vrot.lane.b32.xlu0 %v1104, 96
        %v1120 = vpop.permute.xlu0 %1119
        %1123 = vst.msk [vmem:[#allocation4 + $0x8] sm:$0xf] %vm1097, %v1118
        %1124 = vst.msk [vmem:[#allocation4 + $0xc] sm:$0xf] %vm1097, %v1120
        %1125 = vrot.lane.b32.xlu0 %v1093, 64
        %v1126 = vpop.permute.xlu0 %1125
        %1127 = vrot.lane.b32.xlu0 %v1094, 64
        %v1128 = vpop.permute.xlu0 %1127
        %1131 = vst.msk [vmem:[#allocation3 + $0x10] sm:$0xf] %vm1097, %v1126
        %1132 = vst.msk [vmem:[#allocation3 + $0x14] sm:$0xf] %vm1097, %v1128
        %1133 = vrot.lane.b32.xlu0 %v1103, 64
        %v1134 = vpop.permute.xlu0 %1133
        %1135 = vrot.lane.b32.xlu0 %v1104, 64
        %v1136 = vpop.permute.xlu0 %1135
        %1139 = vst.msk [vmem:[#allocation4 + $0x10] sm:$0xf] %vm1097, %v1134
        %1140 = vst.msk [vmem:[#allocation4 + $0x14] sm:$0xf] %vm1097, %v1136
        %1141 = vrot.lane.b32.xlu0 %v1093, 32
        %v1142 = vpop.permute.xlu0 %1141
        %1143 = vrot.lane.b32.xlu0 %v1094, 32
        %v1144 = vpop.permute.xlu0 %1143
        %1147 = vst.msk [vmem:[#allocation3 + $0x18] sm:$0xf] %vm1097, %v1142
        %1148 = vst.msk [vmem:[#allocation3 + $0x1c] sm:$0xf] %vm1097, %v1144
        %1149 = vrot.lane.b32.xlu0 %v1103, 32
        %v1150 = vpop.permute.xlu0 %1149
        %1151 = vrot.lane.b32.xlu0 %v1104, 32
        %v1152 = vpop.permute.xlu0 %1151
        %1155 = vst.msk [vmem:[#allocation4 + $0x18] sm:$0xf] %vm1097, %v1150
        %1156 = vst.msk [vmem:[#allocation4 + $0x1c] sm:$0xf] %vm1097, %v1152
        %v1157 = vld [vmem:[#allocation3] sm:$0xf]
        %v1158 = vld [vmem:[#allocation3 + $0x4] sm:$0xf]
        %v1159 = vld [vmem:[#allocation3 + $0x8] sm:$0xf]
        %v1160 = vld [vmem:[#allocation3 + $0xc] sm:$0xf]
        %v1161 = vld [vmem:[#allocation3 + $0x10] sm:$0xf]
        %v1162 = vld [vmem:[#allocation3 + $0x14] sm:$0xf]
        %v1163 = vld [vmem:[#allocation3 + $0x18] sm:$0xf]
        %v1164 = vld [vmem:[#allocation3 + $0x1c] sm:$0xf]
        %v1165 = vld [vmem:[#allocation4] sm:$0xf]
        %v1166 = vld [vmem:[#allocation4 + $0x4] sm:$0xf]
        %v1167 = vld [vmem:[#allocation4 + $0x8] sm:$0xf]
        %v1168 = vld [vmem:[#allocation4 + $0xc] sm:$0xf]
        %v1169 = vld [vmem:[#allocation4 + $0x10] sm:$0xf]
        %v1170 = vld [vmem:[#allocation4 + $0x14] sm:$0xf]
        %v1171 = vld [vmem:[#allocation4 + $0x18] sm:$0xf]
        %v1172 = vld [vmem:[#allocation4 + $0x1c] sm:$0xf]
        %v1173 = vld [vmem:[%s1] sm:$0xf]
        %v1174 = vld [vmem:[%s1 + $0x4] sm:$0xf]
        %v1175 = vld [vmem:[%s1 + $0x8] sm:$0xf]
        %v1176 = vld [vmem:[%s1 + $0xc] sm:$0xf]
        %v1185 = vunpack.c.l.b16 %v1165
        %v1186 = vunpack.c.l.b16 %v1166
        %v1187 = vunpack.c.l.b16 %v1167
        %v1188 = vunpack.c.l.b16 %v1168
        %v1189 = vunpack.c.l.b16 %v1169
        %v1190 = vunpack.c.l.b16 %v1170
        %v1191 = vunpack.c.l.b16 %v1171
        %v1192 = vunpack.c.l.b16 %v1172
        %v1193 = vpack.c.b16 %v1186, %v1185
        %v1194 = vpack.c.b16 %v1188, %v1187
        %v1195 = vpack.c.b16 %v1190, %v1189
        %v1196 = vpack.c.b16 %v1192, %v1191
        %v1201 = vunpack.c.l.b16 %v1173
        %v1202 = vunpack.c.l.b16 %v1174
        %v1203 = vunpack.c.l.b16 %v1175
        %v1204 = vunpack.c.l.b16 %v1176
        %v1205 = vpack.c.b16 %v1202, %v1201
        %v1206 = vpack.c.b16 %v1204, %v1203
        %v1210 = vsel %vm594, %v1193, 0
        %v1213 = vsel %vm594, %v1194, 0
        %v1216 = vsel %vm594, %v1195, 0
        %v1219 = vsel %vm594, %v1196, 0
        %1221 = vmatprep.subr.bf16.mxu0 0
        %1222 = vmatpush1.bf16.msra.mxu0 0
        %1223 = vmatprep.subr.bf16.mxu0 0
        %1224 = vmatpush1.bf16.msra.mxu0 0
        %1225 = vmatprep.subr.bf16.mxu0 0
        %1226 = vmatpush1.bf16.msra.mxu0 0
        %1227 = vmatprep.subr.bf16.mxu0 0
        %1228 = vmatpush1.bf16.msra.mxu0 0
        %1229 = vmatprep.subr.bf16.mxu0 0
        %1230 = vmatpush1.bf16.msra.mxu0 0
        %1231 = vmatprep.subr.bf16.mxu0 0
        %1232 = vmatpush1.bf16.msra.mxu0 0
        %1233 = vmatprep.subr.bf16.mxu0 0
        %1234 = vmatpush1.bf16.msra.mxu0 %v1206
        %1235 = vmatprep.subr.bf16.mxu0 0
        %1236 = vmatpush1.bf16.msra.mxu0 %v1205
        %1237 = vmatprep.subr.bf16.mxu0 0
        %1238 = vmatpush2.bf16.msra.mxu0 0
        %1239 = vmatprep.subr.bf16.mxu0 0
        %1240 = vmatpush2.bf16.msra.mxu0 0
        %1241 = vmatprep.subr.bf16.mxu0 0
        %1242 = vmatpush2.bf16.msra.mxu0 0
        %1243 = vmatprep.subr.bf16.mxu0 0
        %1244 = vmatpush2.bf16.msra.mxu0 0
        %1245 = vmatprep.subr.bf16.mxu0 0
        %1246 = vmatpush2.bf16.msra.mxu0 0
        %1247 = vmatprep.subr.bf16.mxu0 0
        %1248 = vmatpush2.bf16.msra.mxu0 0
        %1249 = vmatprep.subr.bf16.mxu0 0
        %1250 = vmatpush2.bf16.msra.mxu0 0
        %1251 = vmatprep.subr.bf16.mxu0 0
        %1252 = vmatpush2.bf16.msra.mxu0 0
        %1253 = vmatprep.mubr.bf16.mxu0 0
        %1254 = vmatmul.mubr.bf16.gmra.mxu0 %v1210
        %v1255 = vpop.f32.mrf.mxu0
        %v1256 = vadd.f32 0.0, %v1255
        %v1257 = vpop.f32.mrf.mxu0
        %v1258 = vpop.f32.mrf.mxu0
        %v1259 = vadd.f32 0.0, %v1258
        %v1260 = vpop.f32.mrf.mxu0
        %1261 = vmatprep.mubr.bf16.mxu0 0
        %1262 = vmatmul.mubr.bf16.gmra.mxu0 %v1213
        %v1263 = vpop.f32.mrf.mxu0
        %v1264 = vadd.f32 0.0, %v1263
        %v1265 = vpop.f32.mrf.mxu0
        %v1266 = vpop.f32.mrf.mxu0
        %v1267 = vadd.f32 0.0, %v1266
        %v1268 = vpop.f32.mrf.mxu0
        %1269 = vmatprep.mubr.bf16.mxu0 0
        %1270 = vmatmul.mubr.bf16.gmra.mxu0 %v1216
        %v1271 = vpop.f32.mrf.mxu0
        %v1272 = vadd.f32 0.0, %v1271
        %v1273 = vpop.f32.mrf.mxu0
        %v1274 = vpop.f32.mrf.mxu0
        %v1275 = vadd.f32 0.0, %v1274
        %v1276 = vpop.f32.mrf.mxu0
        %1277 = vmatprep.mubr.bf16.mxu0 0
        %1278 = vmatmul.mubr.bf16.gmra.mxu0 %v1219
        %v1279 = vpop.f32.mrf.mxu0
        %v1280 = vadd.f32 0.0, %v1279
        %v1281 = vpop.f32.mrf.mxu0
        %v1282 = vpop.f32.mrf.mxu0
        %v1283 = vadd.f32 0.0, %v1282
        %v1284 = vpop.f32.mrf.mxu0
        %1285 = vdwg.mxu0
        %v1286 = vld [vmem:[#allocation2] sm:$0xf]
        %v1287 = vld [vmem:[#allocation2 + $0x4] sm:$0xf]
        %v1290 = vunpack.c.l.b16 %v1286
        %v1291 = vunpack.c.l.b16 %v1287
        %v1292 = vpack.c.b16 %v1291, %v1290
        %v1294 = vsel %vm594, %v1292, 0
        %1296 = vmatprep.subr.bf16.mxu0 0
        %1297 = vmatpush1.bf16.xpose.msra.mxu0 0
        %1298 = vmatprep.subr.bf16.mxu0 0
        %1299 = vmatpush1.bf16.xpose.msra.mxu0 0
        %1300 = vmatprep.subr.bf16.mxu0 0
        %1301 = vmatpush1.bf16.xpose.msra.mxu0 0
        %1302 = vmatprep.subr.bf16.mxu0 0
        %1303 = vmatpush1.bf16.xpose.msra.mxu0 0
        %1304 = vmatprep.subr.bf16.mxu0 0
        %1305 = vmatpush1.bf16.xpose.msra.mxu0 0
        %1306 = vmatprep.subr.bf16.mxu0 0
        %1307 = vmatpush1.bf16.xpose.msra.mxu0 0
        %1308 = vmatprep.subr.bf16.mxu0 0
        %1309 = vmatpush1.bf16.xpose.msra.mxu0 0
        %1310 = vmatprep.subr.bf16.mxu0 0
        %1311 = vmatpush1.bf16.xpose.msra.mxu0 %v1294
        %1312 = vmatprep.subr.bf16.mxu0 0
        %1313 = vmatpush2.bf16.xpose.msra.mxu0 0
        %1314 = vmatprep.subr.bf16.mxu0 0
        %1315 = vmatpush2.bf16.xpose.msra.mxu0 0
        %1316 = vmatprep.subr.bf16.mxu0 0
        %1317 = vmatpush2.bf16.xpose.msra.mxu0 0
        %1318 = vmatprep.subr.bf16.mxu0 0
        %1319 = vmatpush2.bf16.xpose.msra.mxu0 0
        %1320 = vmatprep.subr.bf16.mxu0 0
        %1321 = vmatpush2.bf16.xpose.msra.mxu0 0
        %1322 = vmatprep.subr.bf16.mxu0 0
        %1323 = vmatpush2.bf16.xpose.msra.mxu0 0
        %1324 = vmatprep.subr.bf16.mxu0 0
        %1325 = vmatpush2.bf16.xpose.msra.mxu0 0
        %1326 = vmatprep.subr.bf16.mxu0 0
        %1327 = vmatpush2.bf16.xpose.msra.mxu0 0
        %1328 = vmatprep.mubr.bf16.mxu0 0
        %1329 = vmatmul.mubr.bf16.gmra.mxu0 %v1210
        %v1330 = vpop.f32.mrf.mxu0
        %v1331 = vadd.f32 0.0, %v1330
        %v1332 = vpop.f32.mrf.mxu0
        %v1333 = vpop.f32.mrf.mxu0
        %v1334 = vadd.f32 0.0, %v1333
        %v1335 = vpop.f32.mrf.mxu0
        %1336 = vmatprep.mubr.bf16.mxu0 0
        %1337 = vmatmul.mubr.bf16.gmra.mxu0 %v1213
        %v1338 = vpop.f32.mrf.mxu0
        %v1339 = vadd.f32 0.0, %v1338
        %v1340 = vpop.f32.mrf.mxu0
        %v1341 = vpop.f32.mrf.mxu0
        %v1342 = vadd.f32 0.0, %v1341
        %v1343 = vpop.f32.mrf.mxu0
        %1344 = vmatprep.mubr.bf16.mxu0 0
        %1345 = vmatmul.mubr.bf16.gmra.mxu0 %v1216
        %v1346 = vpop.f32.mrf.mxu0
        %v1347 = vadd.f32 0.0, %v1346
        %v1348 = vpop.f32.mrf.mxu0
        %v1349 = vpop.f32.mrf.mxu0
        %v1350 = vadd.f32 0.0, %v1349
        %v1351 = vpop.f32.mrf.mxu0
        %1352 = vmatprep.mubr.bf16.mxu0 0
        %1353 = vmatmul.mubr.bf16.gmra.mxu0 %v1219
        %v1354 = vpop.f32.mrf.mxu0
        %v1355 = vadd.f32 0.0, %v1354
        %v1356 = vpop.f32.mrf.mxu0
        %v1357 = vpop.f32.mrf.mxu0
        %v1358 = vadd.f32 0.0, %v1357
        %v1359 = vpop.f32.mrf.mxu0
        %1360 = vdwg.mxu0
        %v1361 = vadd.f32 %v1256, %v1331
        %v1362 = vadd.f32 %v1259, %v1334
        %v1363 = vadd.f32 %v1264, %v1339
        %v1364 = vadd.f32 %v1267, %v1342
        %v1365 = vadd.f32 %v1272, %v1347
        %v1366 = vadd.f32 %v1275, %v1350
        %v1367 = vadd.f32 %v1280, %v1355
        %v1368 = vadd.f32 %v1283, %v1358
        %v1369 = vmul.f32 %v1361, 0.088388346
        %v1370 = vmul.f32 %v1362, 0.088388346
        %v1371 = vmul.f32 %v1363, 0.088388346
        %v1372 = vmul.f32 %v1364, 0.088388346
        %v1373 = vmul.f32 %v1365, 0.088388346
        %v1374 = vmul.f32 %v1366, 0.088388346
        %v1375 = vmul.f32 %v1367, 0.088388346
        %v1376 = vmul.f32 %v1368, 0.088388346
        %vm1377 = vcmask 130048
        %v1378 = vsel %vm1377, %v1369, -inf
        %v1379 = vsel %vm1377, %v1370, -inf
        %v1380 = vsel %vm1377, %v1371, -inf
        %v1381 = vsel %vm1377, %v1372, -inf
        %v1382 = vsel %vm1377, %v1373, -inf
        %v1383 = vmax.f32 %v1378, %v1382
        %v1384 = vsel %vm1377, %v1374, -inf
        %v1385 = vmax.f32 %v1379, %v1384
        %v1386 = vsel %vm1377, %v1375, -inf
        %v1387 = vmax.f32 %v1380, %v1386
        %v1388 = vsel %vm1377, %v1376, -inf
        %v1389 = vmax.f32 %v1381, %v1388
        %v1390 = vmax.f32 %v1383, %v1385
        %v1391 = vmax.f32 %v1387, %v1389
        %v1392 = vmax.f32 %v1390, %v1391
        %v1393 = vrot.slane %v1392, 4
        %v1394 = vmax.f32 %v1392, %v1393
        %v1395 = vrot.slane %v1394, 2
        %v1396 = vmax.f32 %v1394, %v1395
        %v1397 = vrot.slane %v1396, 1
        %v1398 = vmax.f32 %v1396, %v1397
        %v1399 = vsub.f32 %v1369, %v1398
        %v1400 = vsub.f32 %v1370, %v1398
        %v1401 = vsub.f32 %v1371, %v1398
        %v1402 = vsub.f32 %v1372, %v1398
        %v1403 = vsub.f32 %v1373, %v1398
        %v1404 = vsub.f32 %v1374, %v1398
        %v1405 = vsub.f32 %v1375, %v1398
        %v1406 = vsub.f32 %v1376, %v1398
        %v1407 = vmul.f32 %v1399, 1.442695
        %v1408 = vpow.pop %v1407
        %v1409 = vmul.f32 %v1400, 1.442695
        %v1410 = vpow.pop %v1409
        %v1411 = vmul.f32 %v1401, 1.442695
        %v1412 = vpow.pop %v1411
        %v1413 = vmul.f32 %v1402, 1.442695
        %v1414 = vpow.pop %v1413
        %v1415 = vmul.f32 %v1403, 1.442695
        %v1416 = vpow.pop %v1415
        %v1417 = vmul.f32 %v1404, 1.442695
        %v1418 = vpow.pop %v1417
        %v1419 = vmul.f32 %v1405, 1.442695
        %v1420 = vpow.pop %v1419
        %v1421 = vmul.f32 %v1406, 1.442695
        %v1422 = vpow.pop %v1421
        %v1423 = vsel %vm1377, %v1408, 0.0
        %v1424 = vsel %vm1377, %v1410, 0.0
        %v1425 = vadd.f32 %v1423, %v1424
        %v1426 = vsel %vm1377, %v1412, 0.0
        %v1427 = vadd.f32 %v1425, %v1426
        %v1428 = vsel %vm1377, %v1414, 0.0
        %v1429 = vadd.f32 %v1427, %v1428
        %v1430 = vsel %vm1377, %v1416, 0.0
        %v1431 = vadd.f32 %v1429, %v1430
        %v1432 = vsel %vm1377, %v1418, 0.0
        %v1433 = vadd.f32 %v1431, %v1432
        %v1434 = vsel %vm1377, %v1420, 0.0
        %v1435 = vadd.f32 %v1433, %v1434
        %v1436 = vsel %vm1377, %v1422, 0.0
        %v1437 = vadd.f32 %v1435, %v1436
        %v1438 = vrot.slane %v1437, 4
        %v1439 = vadd.f32 %v1437, %v1438
        %v1440 = vrot.slane %v1439, 2
        %v1441 = vadd.f32 %v1439, %v1440
        %v1442 = vrot.slane %v1441, 1
        %v1443 = vadd.f32 %v1441, %v1442
        %v1444 = vrcp.pop %v1443
        %v1445 = vmul.f32 %v1408, %v1444
        %v1446 = vmul.f32 %v1410, %v1444
        %v1447 = vmul.f32 %v1412, %v1444
        %v1448 = vmul.f32 %v1414, %v1444
        %v1449 = vmul.f32 %v1416, %v1444
        %v1450 = vmul.f32 %v1418, %v1444
        %v1451 = vmul.f32 %v1420, %v1444
        %v1452 = vmul.f32 %v1422, %v1444
        %v1453 = vpack.c.bf16 %v1446, %v1445
        %v1454 = vpack.c.bf16 %v1448, %v1447
        %v1455 = vpack.c.bf16 %v1450, %v1449
        %v1456 = vpack.c.bf16 %v1452, %v1451
        %1457 = vxpose.xlu0.c.b16.start [1/8] %v1453, 128
        %1458 = vxpose.xlu0.c.b16.cont [2/8] %v1454, 128
        %1459 = vxpose.xlu0.c.b16.cont [3/8] %v1455, 128
        %1460 = vxpose.xlu0.c.b16.cont [4/8] %v1456, 128
        %1461 = vxpose.xlu0.c.b16.cont [5/8] 0, 128
        %1462 = vxpose.xlu0.c.b16.cont [6/8] 0, 128
        %1463 = vxpose.xlu0.c.b16.cont [7/8] 0, 128
        %1464 = vxpose.xlu0.c.b16.end [8/8] 0, 128
        %v1465 = vpop.trf.xlu0
        %v1466 = vpop.trf.xlu0
        %v1467 = vpop.trf.xlu0
        %v1468 = vpop.trf.xlu0
        %v1469 = vpop.trf.xlu0
        %v1470 = vpop.trf.xlu0
        %v1471 = vpop.trf.xlu0
        %v1472 = vpop.trf.xlu0
        %v1481 = vunpack.c.l.b16 %v1157
        %v1482 = vunpack.c.l.b16 %v1158
        %v1483 = vunpack.c.l.b16 %v1159
        %v1484 = vunpack.c.l.b16 %v1160
        %v1485 = vunpack.c.l.b16 %v1161
        %v1486 = vunpack.c.l.b16 %v1162
        %v1487 = vunpack.c.l.b16 %v1163
        %v1488 = vunpack.c.l.b16 %v1164
        %v1489 = vpack.c.b16 %v1482, %v1481
        %v1490 = vpack.c.b16 %v1484, %v1483
        %v1491 = vpack.c.b16 %v1486, %v1485
        %v1492 = vpack.c.b16 %v1488, %v1487
        %vm1497 = vcmask 523264
        %v1499 = vsel %vm1497, %v1465, 0
        %1501 = vmatprep.subr.bf16.mxu0 0
        %1502 = vmatpush1.bf16.msra.mxu0 0
        %1503 = vmatprep.subr.bf16.mxu0 0
        %1504 = vmatpush1.bf16.msra.mxu0 0
        %1505 = vmatprep.subr.bf16.mxu0 0
        %1506 = vmatpush1.bf16.msra.mxu0 0
        %1507 = vmatprep.subr.bf16.mxu0 0
        %1508 = vmatpush1.bf16.msra.mxu0 0
        %1509 = vmatprep.subr.bf16.mxu0 0
        %1510 = vmatpush1.bf16.msra.mxu0 %v1492
        %1511 = vmatprep.subr.bf16.mxu0 0
        %1512 = vmatpush1.bf16.msra.mxu0 %v1491
        %1513 = vmatprep.subr.bf16.mxu0 0
        %1514 = vmatpush1.bf16.msra.mxu0 %v1490
        %1515 = vmatprep.subr.bf16.mxu0 0
        %1516 = vmatpush1.bf16.msra.mxu0 %v1489
        %1517 = vmatprep.subr.bf16.mxu0 0
        %1518 = vmatpush2.bf16.msra.mxu0 0
        %1519 = vmatprep.subr.bf16.mxu0 0
        %1520 = vmatpush2.bf16.msra.mxu0 0
        %1521 = vmatprep.subr.bf16.mxu0 0
        %1522 = vmatpush2.bf16.msra.mxu0 0
        %1523 = vmatprep.subr.bf16.mxu0 0
        %1524 = vmatpush2.bf16.msra.mxu0 0
        %1525 = vmatprep.subr.bf16.mxu0 0
        %1526 = vmatpush2.bf16.msra.mxu0 0
        %1527 = vmatprep.subr.bf16.mxu0 0
        %1528 = vmatpush2.bf16.msra.mxu0 0
        %1529 = vmatprep.subr.bf16.mxu0 0
        %1530 = vmatpush2.bf16.msra.mxu0 0
        %1531 = vmatprep.subr.bf16.mxu0 0
        %1532 = vmatpush2.bf16.msra.mxu0 0
        %1533 = vmatprep.mubr.bf16.mxu0 0
        %1534 = vmatmul.mubr.bf16.gmra.mxu0 %v1499
        %v1535 = vpop.f32.mrf.mxu0
        %v1536 = vadd.f32 0.0, %v1535
        %v1537 = vpop.f32.mrf.mxu0
        %v1538 = vpop.f32.mrf.mxu0
        %v1539 = vadd.f32 0.0, %v1538
        %v1540 = vpop.f32.mrf.mxu0
        %1541 = vdwg.mxu0
        %v1542 = vpack.c.bf16 %v1539, %v1536
        %v1543 = vld [vmem:[%s7] sm:$0xf]
        %v1544 = vld [vmem:[%s7 + $0x4] sm:$0xf]
        %v1545 = vld [vmem:[%s7 + $0x8] sm:$0xf]
        %v1546 = vld [vmem:[%s7 + $0xc] sm:$0xf]
        %v1547 = vld [vmem:[%s8] sm:$0x1]
        %v1549 = vlaneseq
        %v1550 = vshrl.u32 %v1549, 7
        %v1551 = vsub.s32 0, %v1550
        %v1552 = vrot.slane %v1547, %v1551
        %v1558 = vunpack.c.l.b16 %v1543
        %v1559 = vunpack.c.l.b16 %v1544
        %v1560 = vunpack.c.l.b16 %v1545
        %v1561 = vunpack.c.l.b16 %v1546
        %v1562 = vpack.c.b16 %v1559, %v1558
        %v1563 = vpack.c.b16 %v1561, %v1560
        %v1567 = vsel %vm594, %v1542, 0
        %1569 = vmatprep.subr.bf16.mxu0 0
        %1570 = vmatpush1.bf16.msra.mxu0 0
        %1571 = vmatprep.subr.bf16.mxu0 0
        %1572 = vmatpush1.bf16.msra.mxu0 0
        %1573 = vmatprep.subr.bf16.mxu0 0
        %1574 = vmatpush1.bf16.msra.mxu0 0
        %1575 = vmatprep.subr.bf16.mxu0 0
        %1576 = vmatpush1.bf16.msra.mxu0 0
        %1577 = vmatprep.subr.bf16.mxu0 0
        %1578 = vmatpush1.bf16.msra.mxu0 0
        %1579 = vmatprep.subr.bf16.mxu0 0
        %1580 = vmatpush1.bf16.msra.mxu0 0
        %1581 = vmatprep.subr.bf16.mxu0 0
        %1582 = vmatpush1.bf16.msra.mxu0 %v1563
        %1583 = vmatprep.subr.bf16.mxu0 0
        %1584 = vmatpush1.bf16.msra.mxu0 %v1562
        %1585 = vmatprep.subr.bf16.mxu0 0
        %1586 = vmatpush2.bf16.msra.mxu0 0
        %1587 = vmatprep.subr.bf16.mxu0 0
        %1588 = vmatpush2.bf16.msra.mxu0 0
        %1589 = vmatprep.subr.bf16.mxu0 0
        %1590 = vmatpush2.bf16.msra.mxu0 0
        %1591 = vmatprep.subr.bf16.mxu0 0
        %1592 = vmatpush2.bf16.msra.mxu0 0
        %1593 = vmatprep.subr.bf16.mxu0 0
        %1594 = vmatpush2.bf16.msra.mxu0 0
        %1595 = vmatprep.subr.bf16.mxu0 0
        %1596 = vmatpush2.bf16.msra.mxu0 0
        %1597 = vmatprep.subr.bf16.mxu0 0
        %1598 = vmatpush2.bf16.msra.mxu0 0
        %1599 = vmatprep.subr.bf16.mxu0 0
        %1600 = vmatpush2.bf16.msra.mxu0 0
        %1601 = vmatprep.mubr.bf16.mxu0 0
        %1602 = vmatmul.mubr.bf16.gmra.mxu0 %v1567
        %v1603 = vpop.f32.mrf.mxu0
        %v1604 = vadd.f32 %v1552, %v1603
        %v1605 = vpop.f32.mrf.mxu0
        %v1606 = vpop.f32.mrf.mxu0
        %v1607 = vadd.f32 %v1552, %v1606
        %v1608 = vpop.f32.mrf.mxu0
        %1609 = vdwg.mxu0
        %v1610 = vmul.f32 %v1604, 0.5
        %v1611 = vmul.f32 %v1607, 0.5
        %v1612 = vmul.f32 %v1604, 0.044715
        %v1613 = vmul.f32 %v1607, 0.044715
        %v1614 = vmul.f32 %v1612, %v1604
        %v1615 = vmul.f32 %v1613, %v1607
        %v1616 = vmul.f32 %v1614, %v1604
        %v1617 = vmul.f32 %v1615, %v1607
        %v1618 = vadd.f32 %v1604, %v1616
        %v1619 = vadd.f32 %v1607, %v1617
        %v1620 = vmul.f32 %v1618, 0.7978846
        %v1621 = vmul.f32 %v1619, 0.7978846
        %v1622 = vtanh.pop %v1620
        %v1623 = vtanh.pop %v1621
        %v1624 = vadd.f32 %v1622, 1.0
        %v1625 = vadd.f32 %v1623, 1.0
        %v1626 = vmul.f32 %v1610, %v1624
        %v1627 = vmul.f32 %v1611, %v1625
        %v1628 = vpack.c.bf16 %v1627, %v1626
        %v1630 = vsel %vm1377, %v1453, 0
        %v1633 = vsel %vm1377, %v1454, 0
        %v1636 = vsel %vm1377, %v1455, 0
        %v1639 = vsel %vm1377, %v1456, 0
        %1641 = vmatprep.subr.bf16.mxu0 0
        %1642 = vmatpush1.bf16.msra.mxu0 0
        %1643 = vmatprep.subr.bf16.mxu0 0
        %1644 = vmatpush1.bf16.msra.mxu0 0
        %1645 = vmatprep.subr.bf16.mxu0 0
        %1646 = vmatpush1.bf16.msra.mxu0 0
        %1647 = vmatprep.subr.bf16.mxu0 0
        %1648 = vmatpush1.bf16.msra.mxu0 0
        %1649 = vmatprep.subr.bf16.mxu0 0
        %1650 = vmatpush1.bf16.msra.mxu0 0
        %1651 = vmatprep.subr.bf16.mxu0 0
        %1652 = vmatpush1.bf16.msra.mxu0 0
        %1653 = vmatprep.subr.bf16.mxu0 0
        %1654 = vmatpush1.bf16.msra.mxu0 0
        %1655 = vmatprep.subr.bf16.mxu0 0
        %1656 = vmatpush1.bf16.msra.mxu0 %v1628
        %1657 = vmatprep.subr.bf16.mxu0 0
        %1658 = vmatpush2.bf16.msra.mxu0 0
        %1659 = vmatprep.subr.bf16.mxu0 0
        %1660 = vmatpush2.bf16.msra.mxu0 0
        %1661 = vmatprep.subr.bf16.mxu0 0
        %1662 = vmatpush2.bf16.msra.mxu0 0
        %1663 = vmatprep.subr.bf16.mxu0 0
        %1664 = vmatpush2.bf16.msra.mxu0 0
        %1665 = vmatprep.subr.bf16.mxu0 0
        %1666 = vmatpush2.bf16.msra.mxu0 0
        %1667 = vmatprep.subr.bf16.mxu0 0
        %1668 = vmatpush2.bf16.msra.mxu0 0
        %1669 = vmatprep.subr.bf16.mxu0 0
        %1670 = vmatpush2.bf16.msra.mxu0 0
        %1671 = vmatprep.subr.bf16.mxu0 0
        %1672 = vmatpush2.bf16.msra.mxu0 0
        %1673 = vmatprep.mubr.bf16.mxu0 0
        %1674 = vmatmul.mubr.bf16.gmra.mxu0 %v1630
        %v1675 = vpop.f32.mrf.mxu0
        %v1676 = vadd.f32 0.0, %v1675
        %v1677 = vpop.f32.mrf.mxu0
        %v1678 = vpop.f32.mrf.mxu0
        %v1679 = vadd.f32 0.0, %v1678
        %v1680 = vpop.f32.mrf.mxu0
        %1681 = vmatprep.mubr.bf16.mxu0 0
        %1682 = vmatmul.mubr.bf16.gmra.mxu0 %v1633
        %v1683 = vpop.f32.mrf.mxu0
        %v1684 = vadd.f32 0.0, %v1683
        %v1685 = vpop.f32.mrf.mxu0
        %v1686 = vpop.f32.mrf.mxu0
        %v1687 = vadd.f32 0.0, %v1686
        %v1688 = vpop.f32.mrf.mxu0
        %1689 = vmatprep.mubr.bf16.mxu0 0
        %1690 = vmatmul.mubr.bf16.gmra.mxu0 %v1636
        %v1691 = vpop.f32.mrf.mxu0
        %v1692 = vadd.f32 0.0, %v1691
        %v1693 = vpop.f32.mrf.mxu0
        %v1694 = vpop.f32.mrf.mxu0
        %v1695 = vadd.f32 0.0, %v1694
        %v1696 = vpop.f32.mrf.mxu0
        %1697 = vmatprep.mubr.bf16.mxu0 0
        %1698 = vmatmul.mubr.bf16.gmra.mxu0 %v1639
        %v1699 = vpop.f32.mrf.mxu0
        %v1700 = vadd.f32 0.0, %v1699
        %v1701 = vpop.f32.mrf.mxu0
        %v1702 = vpop.f32.mrf.mxu0
        %v1703 = vadd.f32 0.0, %v1702
        %v1704 = vpop.f32.mrf.mxu0
        %1705 = vdwg.mxu0
        %v1706 = vpack.c.bf16 %v1679, %v1676
        %v1708 = vunpack.c.l.b16 %v1706
        %v1709 = vunpack.c.h.b16 %v1706
        %v1710 = vpack.c.b16 %v1708, %v1708
        %v1711 = vpack.c.b16 %v1709, %v1709
        %1714 = vst.msk [vmem:[#allocation5] sm:$0xf] %vm1097, %v1710
        %1715 = vst.msk [vmem:[#allocation5 + $0x4] sm:$0xf] %vm1097, %v1711
        %v1716 = vpack.c.bf16 %v1687, %v1684
        %v1718 = vunpack.c.l.b16 %v1716
        %v1719 = vunpack.c.h.b16 %v1716
        %v1720 = vpack.c.b16 %v1718, %v1718
        %v1721 = vpack.c.b16 %v1719, %v1719
        %1722 = vrot.lane.b32.xlu0 %v1720, 32
        %v1723 = vpop.permute.xlu0 %1722
        %1724 = vrot.lane.b32.xlu0 %v1721, 32
        %v1725 = vpop.permute.xlu0 %1724
        %vm1728 = vcmask 519424
        %1729 = vst.msk [vmem:[#allocation5] sm:$0xf] %vm1728, %v1723
        %1730 = vst.msk [vmem:[#allocation5 + $0x4] sm:$0xf] %vm1728, %v1725
        %v1731 = vpack.c.bf16 %v1695, %v1692
        %v1733 = vunpack.c.l.b16 %v1731
        %v1734 = vunpack.c.h.b16 %v1731
        %v1735 = vpack.c.b16 %v1733, %v1733
        %v1736 = vpack.c.b16 %v1734, %v1734
        %1737 = vrot.lane.b32.xlu0 %v1735, 64
        %v1738 = vpop.permute.xlu0 %1737
        %1739 = vrot.lane.b32.xlu0 %v1736, 64
        %v1740 = vpop.permute.xlu0 %1739
        %vm1743 = vcmask 781824
        %1744 = vst.msk [vmem:[#allocation5] sm:$0xf] %vm1743, %v1738
        %1745 = vst.msk [vmem:[#allocation5 + $0x4] sm:$0xf] %vm1743, %v1740
        %v1746 = vpack.c.bf16 %v1703, %v1700
        %v1748 = vunpack.c.l.b16 %v1746
        %v1749 = vunpack.c.h.b16 %v1746
        %v1750 = vpack.c.b16 %v1748, %v1748
        %v1751 = vpack.c.b16 %v1749, %v1749
        %1752 = vrot.lane.b32.xlu0 %v1750, 96
        %v1753 = vpop.permute.xlu0 %1752
        %1754 = vrot.lane.b32.xlu0 %v1751, 96
        %v1755 = vpop.permute.xlu0 %1754
        %vm1758 = vcmask 1044224
        %1759 = vst.msk [vmem:[#allocation5] sm:$0xf] %vm1758, %v1753
        %1760 = vst.msk [vmem:[#allocation5 + $0x4] sm:$0xf] %vm1758, %v1755
        %v1761 = vld [vmem:[#allocation5] sm:$0xf]
        %v1762 = vld [vmem:[#allocation5 + $0x4] sm:$0xf]
        %v1763 = vld [vmem:[#allocation15] sm:$0xf]
        %v1764 = vld [vmem:[#allocation15 + $0x4] sm:$0xf]
        %v1765 = vld [vmem:[#allocation15 + $0x8] sm:$0xf]
        %v1766 = vld [vmem:[#allocation15 + $0xc] sm:$0xf]
        %v1767 = vld [vmem:[#allocation15 + $0x10] sm:$0xf]
        %v1768 = vld [vmem:[#allocation15 + $0x14] sm:$0xf]
        %v1769 = vld [vmem:[#allocation15 + $0x18] sm:$0xf]
        %v1770 = vld [vmem:[#allocation15 + $0x1c] sm:$0xf]
        %v1771 = vld [vmem:[#allocation15 + $0x20] sm:$0xf]
        %v1772 = vld [vmem:[#allocation15 + $0x24] sm:$0xf]
        %v1773 = vld [vmem:[#allocation15 + $0x28] sm:$0xf]
        %v1774 = vld [vmem:[#allocation15 + $0x2c] sm:$0xf]
        %v1775 = vld [vmem:[#allocation15 + $0x30] sm:$0xf]
        %v1776 = vld [vmem:[#allocation15 + $0x34] sm:$0xf]
        %v1777 = vld [vmem:[#allocation15 + $0x38] sm:$0xf]
        %v1778 = vld [vmem:[#allocation15 + $0x3c] sm:$0xf]
        %v1779 = vld [vmem:[%s10] sm:$0x1]
        %v1781 = vlaneseq
        %v1782 = vshrl.u32 %v1781, 7
        %v1783 = vsub.s32 0, %v1782
        %v1784 = vrot.slane %v1779, %v1783
        %v1788 = vunpack.c.l.b16 %v1761
        %v1789 = vunpack.c.l.b16 %v1762
        %v1790 = vpack.c.b16 %v1789, %v1788
        %v1808 = vunpack.c.l.b16 %v1763
        %v1809 = vunpack.c.l.b16 %v1764
        %v1810 = vunpack.c.l.b16 %v1765
        %v1811 = vunpack.c.l.b16 %v1766
        %v1812 = vunpack.c.l.b16 %v1767
        %v1813 = vunpack.c.l.b16 %v1768
        %v1814 = vunpack.c.l.b16 %v1769
        %v1815 = vunpack.c.l.b16 %v1770
        %v1816 = vunpack.c.l.b16 %v1771
        %v1817 = vunpack.c.l.b16 %v1772
        %v1818 = vunpack.c.l.b16 %v1773
        %v1819 = vunpack.c.l.b16 %v1774
        %v1820 = vunpack.c.l.b16 %v1775
        %v1821 = vunpack.c.l.b16 %v1776
        %v1822 = vunpack.c.l.b16 %v1777
        %v1823 = vunpack.c.l.b16 %v1778
        %v1824 = vpack.c.b16 %v1809, %v1808
        %v1825 = vpack.c.b16 %v1811, %v1810
        %v1826 = vpack.c.b16 %v1813, %v1812
        %v1827 = vpack.c.b16 %v1815, %v1814
        %v1828 = vpack.c.b16 %v1817, %v1816
        %v1829 = vpack.c.b16 %v1819, %v1818
        %v1830 = vpack.c.b16 %v1821, %v1820
        %v1831 = vpack.c.b16 %v1823, %v1822
        %1840 = vmatprep.subr.bf16.mxu0 0
        %1841 = vmatpush1.bf16.msra.mxu0 %v1831
        %1842 = vmatprep.subr.bf16.mxu0 0
        %1843 = vmatpush1.bf16.msra.mxu0 %v1830
        %1844 = vmatprep.subr.bf16.mxu0 0
        %1845 = vmatpush1.bf16.msra.mxu0 %v1829
        %1846 = vmatprep.subr.bf16.mxu0 0
        %1847 = vmatpush1.bf16.msra.mxu0 %v1828
        %1848 = vmatprep.subr.bf16.mxu0 0
        %1849 = vmatpush1.bf16.msra.mxu0 %v1827
        %1850 = vmatprep.subr.bf16.mxu0 0
        %1851 = vmatpush1.bf16.msra.mxu0 %v1826
        %1852 = vmatprep.subr.bf16.mxu0 0
        %1853 = vmatpush1.bf16.msra.mxu0 %v1825
        %1854 = vmatprep.subr.bf16.mxu0 0
        %1855 = vmatpush1.bf16.msra.mxu0 %v1824
        %1856 = vmatprep.subr.bf16.mxu0 0
        %1857 = vmatpush2.bf16.msra.mxu0 0
        %1858 = vmatprep.subr.bf16.mxu0 0
        %1859 = vmatpush2.bf16.msra.mxu0 0
        %1860 = vmatprep.subr.bf16.mxu0 0
        %1861 = vmatpush2.bf16.msra.mxu0 0
        %1862 = vmatprep.subr.bf16.mxu0 0
        %1863 = vmatpush2.bf16.msra.mxu0 0
        %1864 = vmatprep.subr.bf16.mxu0 0
        %1865 = vmatpush2.bf16.msra.mxu0 0
        %1866 = vmatprep.subr.bf16.mxu0 0
        %1867 = vmatpush2.bf16.msra.mxu0 0
        %1868 = vmatprep.subr.bf16.mxu0 0
        %1869 = vmatpush2.bf16.msra.mxu0 0
        %1870 = vmatprep.subr.bf16.mxu0 0
        %1871 = vmatpush2.bf16.msra.mxu0 0
        %1872 = vmatprep.mubr.bf16.mxu0 0
        %1873 = vmatmul.mubr.bf16.gmra.mxu0 %v1790
        %v1874 = vpop.f32.mrf.mxu0
        %v1875 = vadd.f32 %v1784, %v1874
        %v1876 = vpop.f32.mrf.mxu0
        %v1877 = vpop.f32.mrf.mxu0
        %v1878 = vadd.f32 %v1784, %v1877
        %v1879 = vpop.f32.mrf.mxu0
        %1880 = vdwg.mxu0
        %v1881 = vmul.f32 %v1875, 0.5
        %v1882 = vmul.f32 %v1878, 0.5
        %v1883 = vmul.f32 %v1875, 0.044715
        %v1884 = vmul.f32 %v1878, 0.044715
        %v1885 = vmul.f32 %v1883, %v1875
        %v1886 = vmul.f32 %v1884, %v1878
        %v1887 = vmul.f32 %v1885, %v1875
        %v1888 = vmul.f32 %v1886, %v1878
        %v1889 = vadd.f32 %v1875, %v1887
        %v1890 = vadd.f32 %v1878, %v1888
        %v1891 = vmul.f32 %v1889, 0.7978846
        %v1892 = vmul.f32 %v1890, 0.7978846
        %v1893 = vtanh.pop %v1891
        %v1894 = vtanh.pop %v1892
        %v1895 = vadd.f32 %v1893, 1.0
        %v1896 = vadd.f32 %v1894, 1.0
        %v1897 = vmul.f32 %v1881, %v1895
        %v1898 = vmul.f32 %v1882, %v1896
        %s1899 = sld [smem:[#allocation6]]
        %v1900 = vstv %s1899
        %v1901 = vmul.f32 %v1900, %v1897
        %v1902 = vmul.f32 %v1900, %v1898
        %v1903 = vadd.f32 %v492, %v1901
        %v1904 = vadd.f32 %v493, %v1902
        %1905 = vst [vmem:[%s490] sm:$0xff] %v1903
        %1906 = vst [vmem:[%s490 + $0x8] sm:$0xff] %v1904
        %s1907 = sand.u32 %s297, 1
        %s1908 = scalar_lea.sflag [#allocation9], %s1907
        %s1909 = sand.u32 %s297, 1
        %s1910 = smul.addr %s1909, 16
        %s1911 = scalar_lea.vmem [#allocation16], %s1910
        // Predicated region
        $region89: #{tpu_custom_call.1} parent=67 // pred_check
          %p1912 = pneg %p307
        $region90: #{tpu_custom_call.1} parent=67 // pred_check_branch
          %1914 = sbr.rel (%p1912) target = $region92
        $region91: #{tpu_custom_call.1} parent=67 // pred_region
          %s1916 = ssub.s32 256, 256
          %1917 = vsyncadd %s1908, %s1916
          %s1918 = smul.addr %s32, 2
          %s1919 = smul.addr %s1918, 128
          %s1920 = scalar_lea.hbm %s12, %s1919
          %s1921 = sshll.u32 %s1911, 4
          %s1922 = int_to_ptr.vmem [resolvable:$true] %s1921
          %1927 = dma.vmem_to_hbm [thread:$0]  %s1922, 256, %s1920, %s1908, 128, 128, 8
        $region92: #{tpu_custom_call.1} parent=67 // pred_fallthru
          _
      $region68: #{tpu_custom_call.1} parent=5 // pred_fallthru
        _
      %p1928 = scmp.le.s32.totalorder 2, %s27
      // Predicated region
      $region93: #{tpu_custom_call.1} parent=5 // pred_check
        %p1929 = pneg %p1928
      $region94: #{tpu_custom_call.1} parent=5 // pred_check_branch
        %1931 = sbr.rel (%p1929) target = $region96
      $region95: #{tpu_custom_call.1} parent=5 // pred_region
        %s1932 = ssub.s32 %s27, 2
        // Predicated region
        $region97: #{tpu_custom_call.1} parent=95 // pred_check
          %p1933 = pneg %p313
        $region98: #{tpu_custom_call.1} parent=95 // pred_check_branch
          %1935 = sbr.rel (%p1933) target = $region100
        $region99: #{tpu_custom_call.1} parent=95 // pred_region
          %s1936 = sand.u32 %s298, 1
          %s1937 = scalar_lea.sflag [#allocation9], %s1936
          %s1938 = sand.u32 %s298, 1
          %s1939 = smul.addr %s1938, 16
          %s1940 = scalar_lea.vmem [#allocation16], %s1939
          %1941 = dma.done %s1937, 256
        $region100: #{tpu_custom_call.1} parent=95 // pred_fallthru
          _
      $region96: #{tpu_custom_call.1} parent=5 // pred_fallthru
        _
    $region6: #{tpu_custom_call.1} parent=1 // loop_footer
      %s31 = sadd.s32 1, %s27
    $region7: #{tpu_custom_call.1} parent=1 // loop_footer_branch
      %26 = sbr.rel target = $region3
    $region8: #{tpu_custom_call.1} parent=1 // loop_exit
      _
    %1942 = vsyncpa [#allocation8], 1
    %s1943 = scalar_lea.sflag [#allocation8], 1
    %1944 = vsyncpa %s1943, 1
    %1945 = vsyncpa [#allocation11], 1
    %1946 = vsyncpa [#allocation14], 1
    %1947 = vsyncpa [#allocation9], 1
    %s1948 = scalar_lea.sflag [#allocation9], 1
    %1949 = vsyncpa %s1948, 1

</llo_original>
